<compile_context>
chip_gen: v7x
topology: tpu7x:2x2x1
jax: 0.10.0
libtpu: 0.0.40
codegen_flags: <defaults>
</compile_context>

<pallas_src>
import math

import numpy as np
import jax
import jax.numpy as jnp
from jax import lax
from jax.experimental import pallas as pl
from jax.experimental.pallas import tpu as pltpu


# ----------------------------- kernel helpers ------------------------------

def _layer_norm(x, g, b, eps=1e-5):
    mu = jnp.mean(x, axis=-1, keepdims=True)
    var = jnp.mean((x - mu) ** 2, axis=-1, keepdims=True)
    return (x - mu) * lax.rsqrt(var + eps) * g + b


def _make_encoder_layer_kernel(n_heads, d_queries, d_values, b_tile, seq_len,
                               apply_final_ln):
    """One encoder layer: MHA sublayer + position-wise FFN sublayer.

    Processes `b_tile` sequences (b_tile * seq_len rows) per grid step.
    Optionally applies the encoder's final LayerNorm (fused into last layer).
    """
    H, dk, dv, B, S = n_heads, d_queries, d_values, b_tile, seq_len
    scale = 1.0 / math.sqrt(dk)

    def kernel(lens_ref,                                   # scalar prefetch (SMEM)
               x_ref,                                      # (B*S, D) f32
               ln1g, ln1b, wq, bq, wkv, bkv, wo, bo,       # MHA params
               ln2g, ln2b, w1, b1, w2, b2,                 # FFN params
               *rest):
        if apply_final_ln:
            lnf_g, lnf_b, o_ref, ctx_scr = rest
        else:
            o_ref, ctx_scr = rest

        b0 = pl.program_id(0) * B

        x = x_ref[...]                                     # (B*S, D) float32

        # ---- key-padding mask: (B, 1, S), key position < true length ----
        b_iota = lax.broadcasted_iota(jnp.int32, (B, 1, S), 0)
        k_iota = lax.broadcasted_iota(jnp.int32, (B, 1, S), 2)
        lens_bc = jnp.zeros((B, 1, S), jnp.int32)
        for i in range(B):                                 # B is small & static
            lens_bc = jnp.where(b_iota == i, lens_ref[b0 + i], lens_bc)
        key_mask = k_iota < lens_bc                        # (B, 1, S)

        # ---------- Multi-Head Attention sublayer (pre-LN, residual) ----------
        xn = _layer_norm(x, ln1g[...], ln1b[...])
        xn_bf = xn.astype(jnp.bfloat16)

        q = jnp.dot(xn_bf, wq[...],
                    preferred_element_type=jnp.float32) + bq[...]    # (B*S, H*dk)
        kvp = jnp.dot(xn_bf, wkv[...],
                      preferred_element_type=jnp.float32) + bkv[...]  # (B*S, H*(dk+dv))

        q3 = (q * scale).reshape(B, S, H * dk).astype(jnp.bfloat16)
        k3 = kvp[:, :H * dk].reshape(B, S, H * dk).astype(jnp.bfloat16)
        v3 = kvp[:, H * dk:].reshape(B, S, H * dv).astype(jnp.bfloat16)

        # Per-head scores/ctx (inherently block-diagonal over heads), batched
        # over the sequences in this tile; per-head ctx goes into VMEM scratch
        # so the output projection is a single fused matmul against full Wo.
        for h in range(H):                                 # small static loop
            qh = q3[:, :, h * dk:(h + 1) * dk]             # (B, S, dk)
            kh = k3[:, :, h * dk:(h + 1) * dk]             # (B, S, dk)
            vh = v3[:, :, h * dv:(h + 1) * dv]             # (B, S, dv)

            s = jnp.einsum('bqd,bkd->bqk', qh, kh,
                           preferred_element_type=jnp.float32)        # (B, S, S)
            s = jnp.where(key_mask, s, -jnp.inf)
            m = jnp.max(s, axis=-1, keepdims=True)
            e = jnp.exp(s - m)
            inv = pl.reciprocal(jnp.sum(e, axis=-1, keepdims=True), approx=True)
            p = e * inv

            ctx = jnp.einsum('bqk,bkd->bqd', p.astype(jnp.bfloat16), vh,
                             preferred_element_type=jnp.float32)      # (B, S, dv)
            ctx_scr[:, h * dv:(h + 1) * dv] = (
                ctx.reshape(B * S, dv).astype(jnp.bfloat16))

        attn = jnp.dot(ctx_scr[...], wo[...],
                       preferred_element_type=jnp.float32) + bo[...]
        y = attn + x                                        # residual

        # ---------- Position-wise FFN sublayer (pre-LN, residual) ----------
        yn = _layer_norm(y, ln2g[...], ln2b[...]).astype(jnp.bfloat16)
        hid = jnp.maximum(
            jnp.dot(yn, w1[...], preferred_element_type=jnp.float32) + b1[...],
            0.0)
        z = jnp.dot(hid.astype(jnp.bfloat16), w2[...],
                    preferred_element_type=jnp.float32) + b2[...] + y

        if apply_final_ln:
            z = _layer_norm(z, lnf_g[...], lnf_b[...])

        o_ref[...] = z

    return kernel


# ----------------------------- pallas wrappers ------------------------------

def _full_spec(shape):
    nd = len(shape)
    # index_map signature: (grid_idx, lens_prefetch_ref) -> block indices
    return pl.BlockSpec(shape, lambda b, lens, nd=nd: (0,) * nd)


def _pick_b_tile(n_seq, seq_len, max_rows=512):
    """Largest per-step sequence tile that keeps blocks legal and, when
    possible, >= 2 grid steps (so both v7x TensorCores get work)."""
    candidates = [b for b in range(1, n_seq + 1)
                  if n_seq % b == 0
                  and (b == n_seq or (b * seq_len) % 8 == 0)
                  and b * seq_len <= max(max_rows, seq_len)]
    two_step = [b for b in candidates if n_seq // b >= 2]
    pool = two_step or candidates or [1]
    return max(pool)


def _prep_layer(p):
    """Cast matmul weights to bf16 once (outside the kernel)."""
    q = dict(p)
    for k in ("wq", "wkv", "wo", "w1", "w2"):
        q[k] = p[k].astype(jnp.bfloat16)
    return q


def encoder_layer_pallas(x2, lens, p, *, n_heads, d_queries, d_values,
                         seq_len, b_tile, final_ln=None):
    NS, D = x2.shape
    n_seq = NS // seq_len
    rows = b_tile * seq_len
    grid = (n_seq // b_tile,)

    kernel = _make_encoder_layer_kernel(n_heads, d_queries, d_values, b_tile,
                                        seq_len, final_ln is not None)

    param_order = ["ln1_g", "ln1_b", "wq", "bq", "wkv", "bkv", "wo", "bo",
                   "ln2_g", "ln2_b", "w1", "b1", "w2", "b2"]
    params = [p[k] for k in param_order]
    if final_ln is not None:
        params += list(final_ln)

    in_specs = [pl.BlockSpec((rows, D), lambda b, lens: (b, 0))]
    in_specs += [_full_spec(w.shape) for w in params]

    return pl.pallas_call(
        kernel,
        out_shape=jax.ShapeDtypeStruct((NS, D), jnp.float32),
        grid_spec=pltpu.PrefetchScalarGridSpec(
            num_scalar_prefetch=1,
            grid=grid,
            in_specs=in_specs,
            out_specs=pl.BlockSpec((rows, D), lambda b, lens: (b, 0)),
            scratch_shapes=[
                pltpu.VMEM((rows, n_heads * d_values), jnp.bfloat16)],
        ),
        compiler_params=pltpu.CompilerParams(
            dimension_semantics=("parallel",),
            vmem_limit_bytes=48 * 1024 * 1024,
        ),
    )(lens, x2, *params)


def encoder_forward(tokens, lens, params, pos_enc, n_heads, d_queries,
                    d_values, b_tile=None):
    N, S = tokens.shape
    D = params["emb"].shape[1]
    # Embedding gather + scaling + positional encoding (glue in plain JAX).
    x = jnp.take(params["emb"], tokens, axis=0) * math.sqrt(D) + pos_enc[:, :S, :]
    x = x.astype(jnp.float32).reshape(N * S, D)            # flat row matrix

    if b_tile is None:
        b_tile = _pick_b_tile(N, S)

    layers = [_prep_layer(p) for p in params["layers"]]
    n_layers = len(layers)
    for li, lp in enumerate(layers):
        fin = (params["ln_g"], params["ln_b"]) if li == n_layers - 1 else None
        x = encoder_layer_pallas(
            x, lens, lp, n_heads=n_heads, d_queries=d_queries,
            d_values=d_values, seq_len=S, b_tile=b_tile, final_ln=fin)
    return x.reshape(N, S, D)


# ----------------------------- reference (pure JAX) -------------------------

def _ref_forward(tokens, lens, params, pos_enc, n_heads, d_queries, d_values):
    """f32 reference; emulates the kernel's bf16 weight storage so the
    comparison only exercises activation rounding / approx reciprocal."""
    def w(a):
        return a.astype(jnp.bfloat16).astype(jnp.float32)

    N, S = tokens.shape
    D = params["emb"].shape[1]
    x = jnp.take(params["emb"], tokens, axis=0) * math.sqrt(D) + pos_enc[:, :S, :]
    for p in params["layers"]:
        xn = _layer_norm(x, p["ln1_g"], p["ln1_b"])
        q = xn @ w(p["wq"]) + p["bq"]
        kv = xn @ w(p["wkv"]) + p["bkv"]
        k, v = kv[..., : n_heads * d_queries], kv[..., n_heads * d_queries:]
        q = q.reshape(N, S, n_heads, d_queries).transpose(0, 2, 1, 3)
        k = k.reshape(N, S, n_heads, d_queries).transpose(0, 2, 1, 3)
        v = v.reshape(N, S, n_heads, d_values).transpose(0, 2, 1, 3)
        s = jnp.einsum("nhqd,nhkd->nhqk", q, k) / math.sqrt(d_queries)
        key_mask = (jnp.arange(S)[None, None, None, :] < lens[:, None, None, None])
        s = jnp.where(key_mask, s, -jnp.inf)
        p_attn = jax.nn.softmax(s, axis=-1)
        ctx = jnp.einsum("nhqk,nhkd->nhqd", p_attn, v)
        ctx = ctx.transpose(0, 2, 1, 3).reshape(N, S, n_heads * d_values)
        x = ctx @ w(p["wo"]) + p["bo"] + x
        xn = _layer_norm(x, p["ln2_g"], p["ln2_b"])
        x = jnp.maximum(xn @ w(p["w1"]) + p["b1"], 0.0) @ w(p["w2"]) + p["b2"] + x
    return _layer_norm(x, params["ln_g"], params["ln_b"])


# ----------------------------- parameter init -------------------------------

def make_positional_encoding(max_len, d_model):
    pos = np.arange(max_len)[:, None].astype(np.float64)
    i = np.arange(d_model)[None, :]
    angle = pos / np.power(10000.0, (2 * (i // 2)) / d_model)
    pe = np.zeros((max_len, d_model))
    pe[:, 0::2] = np.sin(angle[:, 0::2])
    pe[:, 1::2] = np.cos(angle[:, 1::2])
    return jnp.asarray(pe, jnp.float32)[None]   # (1, max_len, d_model)


def init_params(key, vocab_size, d_model, n_heads, d_queries, d_values,
                d_inner, n_layers):
    def nrm(k, shape, scale=0.02):
        return (scale * jax.random.normal(k, shape)).astype(jnp.float32)

    keys = jax.random.split(key, 1 + n_layers)
    params = {
        "emb": nrm(keys[0], (vocab_size, d_model), 0.1),
        "ln_g": jnp.ones((1, d_model), jnp.float32),
        "ln_b": jnp.zeros((1, d_model), jnp.float32),
        "layers": [],
    }
    for l in range(n_layers):
        ks = jax.random.split(keys[1 + l], 8)
        p = {
            "ln1_g": jnp.ones((1, d_model), jnp.float32),
            "ln1_b": jnp.zeros((1, d_model), jnp.float32),
            "wq": nrm(ks[0], (d_model, n_heads * d_queries)),
            "bq": nrm(ks[1], (1, n_heads * d_queries)),
            "wkv": nrm(ks[2], (d_model, n_heads * (d_queries + d_values))),
            "bkv": nrm(ks[3], (1, n_heads * (d_queries + d_values))),
            "wo": nrm(ks[4], (n_heads * d_values, d_model)),
            "bo": nrm(ks[5], (1, d_model)),
            "ln2_g": jnp.ones((1, d_model), jnp.float32),
            "ln2_b": jnp.zeros((1, d_model), jnp.float32),
            "w1": nrm(ks[6], (d_model, d_inner)),
            "b1": jnp.zeros((1, d_inner), jnp.float32),
            "w2": nrm(ks[7], (d_inner, d_model)),
            "b2": jnp.zeros((1, d_model), jnp.float32),
        }
        params["layers"].append(p)
    return params


# ----------------------------- main ------------------------------------------

if __name__ == "__main__":
    # Small, forward-consistent shapes (2 sequences per grid step, 2 steps).
    N, S = 4, 8
    vocab_size = 50
    d_model, n_heads, d_queries, d_values = 32, 4, 16, 16
    d_inner, n_layers = 64, 2
    max_len = 16

    key = jax.random.PRNGKey(0)
    k_tok, k_par = jax.random.split(key)

    tokens = jax.random.randint(k_tok, (N, S), 0, vocab_size, dtype=jnp.int32)
    lens = jnp.array([8, 5, 3, 7], dtype=jnp.int32)        # true sequence lengths

    pos_enc = make_positional_encoding(max_len, d_model)
    params = init_params(k_par, vocab_size, d_model, n_heads, d_queries,
                         d_values, d_inner, n_layers)

    out = encoder_forward(tokens, lens, params, pos_enc,
                          n_heads, d_queries, d_values)
    out = jax.block_until_ready(out)

    ref = _ref_forward(tokens, lens, params, pos_enc,
                       n_heads, d_queries, d_values)
    ref = jax.block_until_ready(ref)

    assert out.shape == (N, S, d_model)
    np.testing.assert_allclose(np.asarray(out), np.asarray(ref),
                               rtol=2e-2, atol=2e-2)
    print("KERNEL_OK")
</pallas_src>

<mosaic_0001>
module attributes {stable_mosaic.version = 11 : i64} {
  func.func @kernel(%arg0: i32, %arg1: memref<4xi32, #tpu.memory_space<smem>>, %arg2: memref<16x32xf32, #tpu.memory_space<vmem>>, %arg3: memref<1x32xf32, #tpu.memory_space<vmem>>, %arg4: memref<1x32xf32, #tpu.memory_space<vmem>>, %arg5: memref<32x64xbf16, #tpu.memory_space<vmem>>, %arg6: memref<1x64xf32, #tpu.memory_space<vmem>>, %arg7: memref<32x128xbf16, #tpu.memory_space<vmem>>, %arg8: memref<1x128xf32, #tpu.memory_space<vmem>>, %arg9: memref<64x32xbf16, #tpu.memory_space<vmem>>, %arg10: memref<1x32xf32, #tpu.memory_space<vmem>>, %arg11: memref<1x32xf32, #tpu.memory_space<vmem>>, %arg12: memref<1x32xf32, #tpu.memory_space<vmem>>, %arg13: memref<32x64xbf16, #tpu.memory_space<vmem>>, %arg14: memref<1x64xf32, #tpu.memory_space<vmem>>, %arg15: memref<64x32xbf16, #tpu.memory_space<vmem>>, %arg16: memref<1x32xf32, #tpu.memory_space<vmem>>, %arg17: memref<16x32xf32, #tpu.memory_space<vmem>>, %arg18: memref<16x64xbf16, #tpu.memory_space<vmem>>) attributes {dimension_semantics = [#tpu.dimension_semantics<parallel>], iteration_bounds = array<i64: 2>, scalar_prefetch = 1 : i64, scratch_operands = 1 : i64, tpu.core_type = #tpu.core_type<tc>, window_params = [{transform_indices = @transform_0, window_bounds = array<i64: 16, 32>}, {pipeline_mode = #tpu.pipeline_mode<synchronous>, transform_indices = @transform_1, window_bounds = array<i64: 1, 32>}, {pipeline_mode = #tpu.pipeline_mode<synchronous>, transform_indices = @transform_2, window_bounds = array<i64: 1, 32>}, {pipeline_mode = #tpu.pipeline_mode<synchronous>, transform_indices = @transform_3, window_bounds = array<i64: 32, 64>}, {pipeline_mode = #tpu.pipeline_mode<synchronous>, transform_indices = @transform_4, window_bounds = array<i64: 1, 64>}, {pipeline_mode = #tpu.pipeline_mode<synchronous>, transform_indices = @transform_5, window_bounds = array<i64: 32, 128>}, {pipeline_mode = #tpu.pipeline_mode<synchronous>, transform_indices = @transform_6, window_bounds = array<i64: 1, 128>}, {pipeline_mode = #tpu.pipeline_mode<synchronous>, transform_indices = @transform_7, window_bounds = array<i64: 64, 32>}, {pipeline_mode = #tpu.pipeline_mode<synchronous>, transform_indices = @transform_8, window_bounds = array<i64: 1, 32>}, {pipeline_mode = #tpu.pipeline_mode<synchronous>, transform_indices = @transform_9, window_bounds = array<i64: 1, 32>}, {pipeline_mode = #tpu.pipeline_mode<synchronous>, transform_indices = @transform_10, window_bounds = array<i64: 1, 32>}, {pipeline_mode = #tpu.pipeline_mode<synchronous>, transform_indices = @transform_11, window_bounds = array<i64: 32, 64>}, {pipeline_mode = #tpu.pipeline_mode<synchronous>, transform_indices = @transform_12, window_bounds = array<i64: 1, 64>}, {pipeline_mode = #tpu.pipeline_mode<synchronous>, transform_indices = @transform_13, window_bounds = array<i64: 64, 32>}, {pipeline_mode = #tpu.pipeline_mode<synchronous>, transform_indices = @transform_14, window_bounds = array<i64: 1, 32>}, {transform_indices = @transform_15, window_bounds = array<i64: 16, 32>}]} {
    %c2_i32 = arith.constant 2 : i32
    %0 = arith.muli %arg0, %c2_i32 : i32
    %c0 = arith.constant 0 : index
    %c0_0 = arith.constant 0 : index
    %1 = vector.load %arg2[%c0, %c0_0] : memref<16x32xf32, #tpu.memory_space<vmem>>, vector<16x32xf32>
    %2 = tpu.iota {dimensions = array<i32: 0>} : vector<2x1x8xi32>
    %3 = tpu.iota {dimensions = array<i32: 2>} : vector<2x1x8xi32>
    %c0_i32 = arith.constant 0 : i32
    %4 = vector.broadcast %c0_i32 : i32 to vector<2x1x8xi32>
    %c0_i32_1 = arith.constant 0 : i32
    %5 = vector.broadcast %c0_i32_1 : i32 to vector<2x1x8xi32>
    %6 = arith.cmpi eq, %2, %5 : vector<2x1x8xi32>
    %c0_i32_2 = arith.constant 0 : i32
    %7 = arith.addi %0, %c0_i32_2 : i32
    %8 = arith.index_cast %7 : i32 to index
    %9 = memref.load %arg1[%8] : memref<4xi32, #tpu.memory_space<smem>>
    %10 = vector.broadcast %9 : i32 to vector<2x1x8xi32>
    %11 = arith.select %6, %10, %4 : vector<2x1x8xi1>, vector<2x1x8xi32>
    %c1_i32 = arith.constant 1 : i32
    %12 = vector.broadcast %c1_i32 : i32 to vector<2x1x8xi32>
    %13 = arith.cmpi eq, %2, %12 : vector<2x1x8xi32>
    %c1_i32_3 = arith.constant 1 : i32
    %14 = arith.addi %0, %c1_i32_3 : i32
    %15 = arith.index_cast %14 : i32 to index
    %16 = memref.load %arg1[%15] : memref<4xi32, #tpu.memory_space<smem>>
    %17 = vector.broadcast %16 : i32 to vector<2x1x8xi32>
    %18 = arith.select %13, %17, %11 : vector<2x1x8xi1>, vector<2x1x8xi32>
    %19 = arith.cmpi slt, %3, %18 : vector<2x1x8xi32>
    %c0_4 = arith.constant 0 : index
    %c0_5 = arith.constant 0 : index
    %20 = vector.load %arg3[%c0_4, %c0_5] : memref<1x32xf32, #tpu.memory_space<vmem>>, vector<1x32xf32>
    %c0_6 = arith.constant 0 : index
    %c0_7 = arith.constant 0 : index
    %21 = vector.load %arg4[%c0_6, %c0_7] : memref<1x32xf32, #tpu.memory_space<vmem>>, vector<1x32xf32>
    %cst = arith.constant dense<0.000000e+00> : vector<16xf32>
    %22 = vector.multi_reduction <add>, %1, %cst [1] : vector<16x32xf32> to vector<16xf32>
    %23 = vector.shape_cast %22 : vector<16xf32> to vector<16x1xf32>
    %cst_8 = arith.constant 3.200000e+01 : f32
    %24 = vector.broadcast %cst_8 : f32 to vector<16x1xf32>
    %25 = arith.divf %23, %24 : vector<16x1xf32>
    %26 = vector.broadcast %25 : vector<16x1xf32> to vector<16x32xf32>
    %27 = arith.subf %1, %26 : vector<16x32xf32>
    %28 = arith.mulf %27, %27 : vector<16x32xf32>
    %cst_9 = arith.constant dense<0.000000e+00> : vector<16xf32>
    %29 = vector.multi_reduction <add>, %28, %cst_9 [1] : vector<16x32xf32> to vector<16xf32>
    %30 = vector.shape_cast %29 : vector<16xf32> to vector<16x1xf32>
    %cst_10 = arith.constant 3.200000e+01 : f32
    %31 = vector.broadcast %cst_10 : f32 to vector<16x1xf32>
    %32 = arith.divf %30, %31 : vector<16x1xf32>
    %33 = vector.broadcast %25 : vector<16x1xf32> to vector<16x32xf32>
    %34 = arith.subf %1, %33 : vector<16x32xf32>
    %cst_11 = arith.constant 9.99999974E-6 : f32
    %35 = vector.broadcast %cst_11 : f32 to vector<16x1xf32>
    %36 = arith.addf %32, %35 : vector<16x1xf32>
    %37 = math.rsqrt %36 : vector<16x1xf32>
    %38 = vector.broadcast %37 : vector<16x1xf32> to vector<16x32xf32>
    %39 = arith.mulf %34, %38 : vector<16x32xf32>
    %40 = vector.broadcast %20 : vector<1x32xf32> to vector<16x32xf32>
    %41 = arith.mulf %39, %40 : vector<16x32xf32>
    %42 = vector.broadcast %21 : vector<1x32xf32> to vector<16x32xf32>
    %43 = arith.addf %41, %42 : vector<16x32xf32>
    %44 = arith.truncf %43 : vector<16x32xf32> to vector<16x32xbf16>
    %c0_12 = arith.constant 0 : index
    %c0_13 = arith.constant 0 : index
    %45 = vector.load %arg5[%c0_12, %c0_13] : memref<32x64xbf16, #tpu.memory_space<vmem>>, vector<32x64xbf16>
    %cst_14 = arith.constant dense<0.000000e+00> : vector<16x64xf32>
    %46 = tpu.matmul %44, %45, %cst_14 {dimension_numbers = #tpu.dot_dimension_numbers<[1], [0], [0], [1], [0, 0, 1, 1], [], []>} : vector<16x32xbf16>, vector<32x64xbf16>, vector<16x64xf32> -> vector<16x64xf32>
    %c0_15 = arith.constant 0 : index
    %c0_16 = arith.constant 0 : index
    %47 = vector.load %arg6[%c0_15, %c0_16] : memref<1x64xf32, #tpu.memory_space<vmem>>, vector<1x64xf32>
    %48 = vector.broadcast %47 : vector<1x64xf32> to vector<16x64xf32>
    %49 = arith.addf %46, %48 : vector<16x64xf32>
    %c0_17 = arith.constant 0 : index
    %c0_18 = arith.constant 0 : index
    %50 = vector.load %arg7[%c0_17, %c0_18] : memref<32x128xbf16, #tpu.memory_space<vmem>>, vector<32x128xbf16>
    %cst_19 = arith.constant dense<0.000000e+00> : vector<16x128xf32>
    %51 = tpu.matmul %44, %50, %cst_19 {dimension_numbers = #tpu.dot_dimension_numbers<[1], [0], [0], [1], [0, 0, 1, 1], [], []>} : vector<16x32xbf16>, vector<32x128xbf16>, vector<16x128xf32> -> vector<16x128xf32>
    %c0_20 = arith.constant 0 : index
    %c0_21 = arith.constant 0 : index
    %52 = vector.load %arg8[%c0_20, %c0_21] : memref<1x128xf32, #tpu.memory_space<vmem>>, vector<1x128xf32>
    %53 = vector.broadcast %52 : vector<1x128xf32> to vector<16x128xf32>
    %54 = arith.addf %51, %53 : vector<16x128xf32>
    %cst_22 = arith.constant 2.500000e-01 : f32
    %55 = vector.broadcast %cst_22 : f32 to vector<16x64xf32>
    %56 = arith.mulf %49, %55 : vector<16x64xf32>
    %57 = vector.shape_cast %56 : vector<16x64xf32> to vector<2x8x64xf32>
    %58 = arith.truncf %57 : vector<2x8x64xf32> to vector<2x8x64xbf16>
    %59 = vector.extract_strided_slice %54 {offsets = [0, 0], sizes = [16, 64], strides = [1, 1]} : vector<16x128xf32> to vector<16x64xf32>
    %60 = vector.shape_cast %59 : vector<16x64xf32> to vector<2x8x64xf32>
    %61 = arith.truncf %60 : vector<2x8x64xf32> to vector<2x8x64xbf16>
    %62 = vector.extract_strided_slice %54 {offsets = [0, 64], sizes = [16, 64], strides = [1, 1]} : vector<16x128xf32> to vector<16x64xf32>
    %63 = vector.shape_cast %62 : vector<16x64xf32> to vector<2x8x64xf32>
    %64 = arith.truncf %63 : vector<2x8x64xf32> to vector<2x8x64xbf16>
    %65 = vector.extract_strided_slice %58 {offsets = [0, 0, 0], sizes = [2, 8, 16], strides = [1, 1, 1]} : vector<2x8x64xbf16> to vector<2x8x16xbf16>
    %66 = vector.extract_strided_slice %61 {offsets = [0, 0, 0], sizes = [2, 8, 16], strides = [1, 1, 1]} : vector<2x8x64xbf16> to vector<2x8x16xbf16>
    %67 = vector.extract_strided_slice %64 {offsets = [0, 0, 0], sizes = [2, 8, 16], strides = [1, 1, 1]} : vector<2x8x64xbf16> to vector<2x8x16xbf16>
    "tpu.trace_start"() <{level = 10 : i32, message = "bqd,bkd->bqk"}> : () -> ()
    %cst_23 = arith.constant dense<0.000000e+00> : vector<2x8x8xf32>
    %68 = tpu.matmul %65, %66, %cst_23 {dimension_numbers = #tpu.dot_dimension_numbers<[2], [2], [1], [1], [0, 0, 0, 1, 1, 1], [0], [0]>} : vector<2x8x16xbf16>, vector<2x8x16xbf16>, vector<2x8x8xf32> -> vector<2x8x8xf32>
    %cst_24 = arith.constant 0xFF800000 : f32
    "tpu.trace_stop"() : () -> ()
    %69 = vector.shape_cast %19 : vector<2x1x8xi1> to vector<2x1x8xi1>
    %70 = vector.broadcast %69 : vector<2x1x8xi1> to vector<2x8x8xi1>
    %71 = vector.broadcast %cst_24 : f32 to vector<2x8x8xf32>
    %72 = arith.select %70, %68, %71 : vector<2x8x8xi1>, vector<2x8x8xf32>
    %cst_25 = arith.constant dense<0xFF800000> : vector<2x8xf32>
    %73 = vector.multi_reduction <maximumf>, %72, %cst_25 [2] : vector<2x8x8xf32> to vector<2x8xf32>
    %74 = vector.shape_cast %73 : vector<2x8xf32> to vector<2x8x1xf32>
    %75 = vector.broadcast %74 : vector<2x8x1xf32> to vector<2x8x8xf32>
    %76 = arith.subf %72, %75 : vector<2x8x8xf32>
    %77 = math.exp %76 : vector<2x8x8xf32>
    %cst_26 = arith.constant dense<0.000000e+00> : vector<2x8xf32>
    %78 = vector.multi_reduction <add>, %77, %cst_26 [2] : vector<2x8x8xf32> to vector<2x8xf32>
    %79 = vector.shape_cast %78 : vector<2x8xf32> to vector<2x8x1xf32>
    %80 = tpu.reciprocal %79 {approx = true} : vector<2x8x1xf32> -> vector<2x8x1xf32>
    %81 = vector.broadcast %80 : vector<2x8x1xf32> to vector<2x8x8xf32>
    %82 = arith.mulf %77, %81 : vector<2x8x8xf32>
    %83 = arith.truncf %82 : vector<2x8x8xf32> to vector<2x8x8xbf16>
    "tpu.trace_start"() <{level = 10 : i32, message = "bqk,bkd->bqd"}> : () -> ()
    %cst_27 = arith.constant dense<0.000000e+00> : vector<2x8x16xf32>
    %84 = tpu.matmul %83, %67, %cst_27 {dimension_numbers = #tpu.dot_dimension_numbers<[2], [1], [1], [2], [0, 0, 0, 1, 1, 2], [0], [0]>} : vector<2x8x8xbf16>, vector<2x8x16xbf16>, vector<2x8x16xf32> -> vector<2x8x16xf32>
    "tpu.trace_stop"() : () -> ()
    %85 = vector.shape_cast %84 : vector<2x8x16xf32> to vector<16x16xf32>
    %86 = arith.truncf %85 : vector<16x16xf32> to vector<16x16xbf16>
    %c0_28 = arith.constant 0 : index
    %c0_29 = arith.constant 0 : index
    %87 = vector.load %arg18[%c0_28, %c0_29] : memref<16x64xbf16, #tpu.memory_space<vmem>>, vector<16x16xbf16>
    tpu.vector_store %arg18[%c0_28, %c0_29], %86 {strides = array<i32>} : memref<16x64xbf16, #tpu.memory_space<vmem>>, vector<16x16xbf16>,
    %88 = vector.extract_strided_slice %58 {offsets = [0, 0, 16], sizes = [2, 8, 16], strides = [1, 1, 1]} : vector<2x8x64xbf16> to vector<2x8x16xbf16>
    %89 = vector.extract_strided_slice %61 {offsets = [0, 0, 16], sizes = [2, 8, 16], strides = [1, 1, 1]} : vector<2x8x64xbf16> to vector<2x8x16xbf16>
    %90 = vector.extract_strided_slice %64 {offsets = [0, 0, 16], sizes = [2, 8, 16], strides = [1, 1, 1]} : vector<2x8x64xbf16> to vector<2x8x16xbf16>
    "tpu.trace_start"() <{level = 10 : i32, message = "bqd,bkd->bqk"}> : () -> ()
    %cst_30 = arith.constant dense<0.000000e+00> : vector<2x8x8xf32>
    %91 = tpu.matmul %88, %89, %cst_30 {dimension_numbers = #tpu.dot_dimension_numbers<[2], [2], [1], [1], [0, 0, 0, 1, 1, 1], [0], [0]>} : vector<2x8x16xbf16>, vector<2x8x16xbf16>, vector<2x8x8xf32> -> vector<2x8x8xf32>
    %cst_31 = arith.constant 0xFF800000 : f32
    "tpu.trace_stop"() : () -> ()
    %92 = vector.shape_cast %19 : vector<2x1x8xi1> to vector<2x1x8xi1>
    %93 = vector.broadcast %92 : vector<2x1x8xi1> to vector<2x8x8xi1>
    %94 = vector.broadcast %cst_31 : f32 to vector<2x8x8xf32>
    %95 = arith.select %93, %91, %94 : vector<2x8x8xi1>, vector<2x8x8xf32>
    %cst_32 = arith.constant dense<0xFF800000> : vector<2x8xf32>
    %96 = vector.multi_reduction <maximumf>, %95, %cst_32 [2] : vector<2x8x8xf32> to vector<2x8xf32>
    %97 = vector.shape_cast %96 : vector<2x8xf32> to vector<2x8x1xf32>
    %98 = vector.broadcast %97 : vector<2x8x1xf32> to vector<2x8x8xf32>
    %99 = arith.subf %95, %98 : vector<2x8x8xf32>
    %100 = math.exp %99 : vector<2x8x8xf32>
    %cst_33 = arith.constant dense<0.000000e+00> : vector<2x8xf32>
    %101 = vector.multi_reduction <add>, %100, %cst_33 [2] : vector<2x8x8xf32> to vector<2x8xf32>
    %102 = vector.shape_cast %101 : vector<2x8xf32> to vector<2x8x1xf32>
    %103 = tpu.reciprocal %102 {approx = true} : vector<2x8x1xf32> -> vector<2x8x1xf32>
    %104 = vector.broadcast %103 : vector<2x8x1xf32> to vector<2x8x8xf32>
    %105 = arith.mulf %100, %104 : vector<2x8x8xf32>
    %106 = arith.truncf %105 : vector<2x8x8xf32> to vector<2x8x8xbf16>
    "tpu.trace_start"() <{level = 10 : i32, message = "bqk,bkd->bqd"}> : () -> ()
    %cst_34 = arith.constant dense<0.000000e+00> : vector<2x8x16xf32>
    %107 = tpu.matmul %106, %90, %cst_34 {dimension_numbers = #tpu.dot_dimension_numbers<[2], [1], [1], [2], [0, 0, 0, 1, 1, 2], [0], [0]>} : vector<2x8x8xbf16>, vector<2x8x16xbf16>, vector<2x8x16xf32> -> vector<2x8x16xf32>
    "tpu.trace_stop"() : () -> ()
    %108 = vector.shape_cast %107 : vector<2x8x16xf32> to vector<16x16xf32>
    %109 = arith.truncf %108 : vector<16x16xf32> to vector<16x16xbf16>
    %c0_35 = arith.constant 0 : index
    %c16 = arith.constant 16 : index
    %110 = vector.load %arg18[%c0_35, %c16] : memref<16x64xbf16, #tpu.memory_space<vmem>>, vector<16x16xbf16>
    tpu.vector_store %arg18[%c0_35, %c16], %109 {strides = array<i32>} : memref<16x64xbf16, #tpu.memory_space<vmem>>, vector<16x16xbf16>,
    %111 = vector.extract_strided_slice %58 {offsets = [0, 0, 32], sizes = [2, 8, 16], strides = [1, 1, 1]} : vector<2x8x64xbf16> to vector<2x8x16xbf16>
    %112 = vector.extract_strided_slice %61 {offsets = [0, 0, 32], sizes = [2, 8, 16], strides = [1, 1, 1]} : vector<2x8x64xbf16> to vector<2x8x16xbf16>
    %113 = vector.extract_strided_slice %64 {offsets = [0, 0, 32], sizes = [2, 8, 16], strides = [1, 1, 1]} : vector<2x8x64xbf16> to vector<2x8x16xbf16>
    "tpu.trace_start"() <{level = 10 : i32, message = "bqd,bkd->bqk"}> : () -> ()
    %cst_36 = arith.constant dense<0.000000e+00> : vector<2x8x8xf32>
    %114 = tpu.matmul %111, %112, %cst_36 {dimension_numbers = #tpu.dot_dimension_numbers<[2], [2], [1], [1], [0, 0, 0, 1, 1, 1], [0], [0]>} : vector<2x8x16xbf16>, vector<2x8x16xbf16>, vector<2x8x8xf32> -> vector<2x8x8xf32>
    %cst_37 = arith.constant 0xFF800000 : f32
    "tpu.trace_stop"() : () -> ()
    %115 = vector.shape_cast %19 : vector<2x1x8xi1> to vector<2x1x8xi1>
    %116 = vector.broadcast %115 : vector<2x1x8xi1> to vector<2x8x8xi1>
    %117 = vector.broadcast %cst_37 : f32 to vector<2x8x8xf32>
    %118 = arith.select %116, %114, %117 : vector<2x8x8xi1>, vector<2x8x8xf32>
    %cst_38 = arith.constant dense<0xFF800000> : vector<2x8xf32>
    %119 = vector.multi_reduction <maximumf>, %118, %cst_38 [2] : vector<2x8x8xf32> to vector<2x8xf32>
    %120 = vector.shape_cast %119 : vector<2x8xf32> to vector<2x8x1xf32>
    %121 = vector.broadcast %120 : vector<2x8x1xf32> to vector<2x8x8xf32>
    %122 = arith.subf %118, %121 : vector<2x8x8xf32>
    %123 = math.exp %122 : vector<2x8x8xf32>
    %cst_39 = arith.constant dense<0.000000e+00> : vector<2x8xf32>
    %124 = vector.multi_reduction <add>, %123, %cst_39 [2] : vector<2x8x8xf32> to vector<2x8xf32>
    %125 = vector.shape_cast %124 : vector<2x8xf32> to vector<2x8x1xf32>
    %126 = tpu.reciprocal %125 {approx = true} : vector<2x8x1xf32> -> vector<2x8x1xf32>
    %127 = vector.broadcast %126 : vector<2x8x1xf32> to vector<2x8x8xf32>
    %128 = arith.mulf %123, %127 : vector<2x8x8xf32>
    %129 = arith.truncf %128 : vector<2x8x8xf32> to vector<2x8x8xbf16>
    "tpu.trace_start"() <{level = 10 : i32, message = "bqk,bkd->bqd"}> : () -> ()
    %cst_40 = arith.constant dense<0.000000e+00> : vector<2x8x16xf32>
    %130 = tpu.matmul %129, %113, %cst_40 {dimension_numbers = #tpu.dot_dimension_numbers<[2], [1], [1], [2], [0, 0, 0, 1, 1, 2], [0], [0]>} : vector<2x8x8xbf16>, vector<2x8x16xbf16>, vector<2x8x16xf32> -> vector<2x8x16xf32>
    "tpu.trace_stop"() : () -> ()
    %131 = vector.shape_cast %130 : vector<2x8x16xf32> to vector<16x16xf32>
    %132 = arith.truncf %131 : vector<16x16xf32> to vector<16x16xbf16>
    %c0_41 = arith.constant 0 : index
    %c32 = arith.constant 32 : index
    %133 = vector.load %arg18[%c0_41, %c32] : memref<16x64xbf16, #tpu.memory_space<vmem>>, vector<16x16xbf16>
    tpu.vector_store %arg18[%c0_41, %c32], %132 {strides = array<i32>} : memref<16x64xbf16, #tpu.memory_space<vmem>>, vector<16x16xbf16>,
    %134 = vector.extract_strided_slice %58 {offsets = [0, 0, 48], sizes = [2, 8, 16], strides = [1, 1, 1]} : vector<2x8x64xbf16> to vector<2x8x16xbf16>
    %135 = vector.extract_strided_slice %61 {offsets = [0, 0, 48], sizes = [2, 8, 16], strides = [1, 1, 1]} : vector<2x8x64xbf16> to vector<2x8x16xbf16>
    %136 = vector.extract_strided_slice %64 {offsets = [0, 0, 48], sizes = [2, 8, 16], strides = [1, 1, 1]} : vector<2x8x64xbf16> to vector<2x8x16xbf16>
    "tpu.trace_start"() <{level = 10 : i32, message = "bqd,bkd->bqk"}> : () -> ()
    %cst_42 = arith.constant dense<0.000000e+00> : vector<2x8x8xf32>
    %137 = tpu.matmul %134, %135, %cst_42 {dimension_numbers = #tpu.dot_dimension_numbers<[2], [2], [1], [1], [0, 0, 0, 1, 1, 1], [0], [0]>} : vector<2x8x16xbf16>, vector<2x8x16xbf16>, vector<2x8x8xf32> -> vector<2x8x8xf32>
    %cst_43 = arith.constant 0xFF800000 : f32
    "tpu.trace_stop"() : () -> ()
    %138 = vector.shape_cast %19 : vector<2x1x8xi1> to vector<2x1x8xi1>
    %139 = vector.broadcast %138 : vector<2x1x8xi1> to vector<2x8x8xi1>
    %140 = vector.broadcast %cst_43 : f32 to vector<2x8x8xf32>
    %141 = arith.select %139, %137, %140 : vector<2x8x8xi1>, vector<2x8x8xf32>
    %cst_44 = arith.constant dense<0xFF800000> : vector<2x8xf32>
    %142 = vector.multi_reduction <maximumf>, %141, %cst_44 [2] : vector<2x8x8xf32> to vector<2x8xf32>
    %143 = vector.shape_cast %142 : vector<2x8xf32> to vector<2x8x1xf32>
    %144 = vector.broadcast %143 : vector<2x8x1xf32> to vector<2x8x8xf32>
    %145 = arith.subf %141, %144 : vector<2x8x8xf32>
    %146 = math.exp %145 : vector<2x8x8xf32>
    %cst_45 = arith.constant dense<0.000000e+00> : vector<2x8xf32>
    %147 = vector.multi_reduction <add>, %146, %cst_45 [2] : vector<2x8x8xf32> to vector<2x8xf32>
    %148 = vector.shape_cast %147 : vector<2x8xf32> to vector<2x8x1xf32>
    %149 = tpu.reciprocal %148 {approx = true} : vector<2x8x1xf32> -> vector<2x8x1xf32>
    %150 = vector.broadcast %149 : vector<2x8x1xf32> to vector<2x8x8xf32>
    %151 = arith.mulf %146, %150 : vector<2x8x8xf32>
    %152 = arith.truncf %151 : vector<2x8x8xf32> to vector<2x8x8xbf16>
    "tpu.trace_start"() <{level = 10 : i32, message = "bqk,bkd->bqd"}> : () -> ()
    %cst_46 = arith.constant dense<0.000000e+00> : vector<2x8x16xf32>
    %153 = tpu.matmul %152, %136, %cst_46 {dimension_numbers = #tpu.dot_dimension_numbers<[2], [1], [1], [2], [0, 0, 0, 1, 1, 2], [0], [0]>} : vector<2x8x8xbf16>, vector<2x8x16xbf16>, vector<2x8x16xf32> -> vector<2x8x16xf32>
    "tpu.trace_stop"() : () -> ()
    %154 = vector.shape_cast %153 : vector<2x8x16xf32> to vector<16x16xf32>
    %155 = arith.truncf %154 : vector<16x16xf32> to vector<16x16xbf16>
    %c0_47 = arith.constant 0 : index
    %c48 = arith.constant 48 : index
    %156 = vector.load %arg18[%c0_47, %c48] : memref<16x64xbf16, #tpu.memory_space<vmem>>, vector<16x16xbf16>
    tpu.vector_store %arg18[%c0_47, %c48], %155 {strides = array<i32>} : memref<16x64xbf16, #tpu.memory_space<vmem>>, vector<16x16xbf16>,
    %c0_48 = arith.constant 0 : index
    %c0_49 = arith.constant 0 : index
    %157 = vector.load %arg18[%c0_48, %c0_49] : memref<16x64xbf16, #tpu.memory_space<vmem>>, vector<16x64xbf16>
    %c0_50 = arith.constant 0 : index
    %c0_51 = arith.constant 0 : index
    %158 = vector.load %arg9[%c0_50, %c0_51] : memref<64x32xbf16, #tpu.memory_space<vmem>>, vector<64x32xbf16>
    %cst_52 = arith.constant dense<0.000000e+00> : vector<16x32xf32>
    %159 = tpu.matmul %157, %158, %cst_52 {dimension_numbers = #tpu.dot_dimension_numbers<[1], [0], [0], [1], [0, 0, 1, 1], [], []>} : vector<16x64xbf16>, vector<64x32xbf16>, vector<16x32xf32> -> vector<16x32xf32>
    %c0_53 = arith.constant 0 : index
    %c0_54 = arith.constant 0 : index
    %160 = vector.load %arg10[%c0_53, %c0_54] : memref<1x32xf32, #tpu.memory_space<vmem>>, vector<1x32xf32>
    %161 = vector.broadcast %160 : vector<1x32xf32> to vector<16x32xf32>
    %162 = arith.addf %159, %161 : vector<16x32xf32>
    %163 = arith.addf %162, %1 : vector<16x32xf32>
    %c0_55 = arith.constant 0 : index
    %c0_56 = arith.constant 0 : index
    %164 = vector.load %arg11[%c0_55, %c0_56] : memref<1x32xf32, #tpu.memory_space<vmem>>, vector<1x32xf32>
    %c0_57 = arith.constant 0 : index
    %c0_58 = arith.constant 0 : index
    %165 = vector.load %arg12[%c0_57, %c0_58] : memref<1x32xf32, #tpu.memory_space<vmem>>, vector<1x32xf32>
    %cst_59 = arith.constant dense<0.000000e+00> : vector<16xf32>
    %166 = vector.multi_reduction <add>, %163, %cst_59 [1] : vector<16x32xf32> to vector<16xf32>
    %167 = vector.shape_cast %166 : vector<16xf32> to vector<16x1xf32>
    %cst_60 = arith.constant 3.200000e+01 : f32
    %168 = vector.broadcast %cst_60 : f32 to vector<16x1xf32>
    %169 = arith.divf %167, %168 : vector<16x1xf32>
    %170 = vector.broadcast %169 : vector<16x1xf32> to vector<16x32xf32>
    %171 = arith.subf %163, %170 : vector<16x32xf32>
    %172 = arith.mulf %171, %171 : vector<16x32xf32>
    %cst_61 = arith.constant dense<0.000000e+00> : vector<16xf32>
    %173 = vector.multi_reduction <add>, %172, %cst_61 [1] : vector<16x32xf32> to vector<16xf32>
    %174 = vector.shape_cast %173 : vector<16xf32> to vector<16x1xf32>
    %cst_62 = arith.constant 3.200000e+01 : f32
    %175 = vector.broadcast %cst_62 : f32 to vector<16x1xf32>
    %176 = arith.divf %174, %175 : vector<16x1xf32>
    %177 = vector.broadcast %169 : vector<16x1xf32> to vector<16x32xf32>
    %178 = arith.subf %163, %177 : vector<16x32xf32>
    %cst_63 = arith.constant 9.99999974E-6 : f32
    %179 = vector.broadcast %cst_63 : f32 to vector<16x1xf32>
    %180 = arith.addf %176, %179 : vector<16x1xf32>
    %181 = math.rsqrt %180 : vector<16x1xf32>
    %182 = vector.broadcast %181 : vector<16x1xf32> to vector<16x32xf32>
    %183 = arith.mulf %178, %182 : vector<16x32xf32>
    %184 = vector.broadcast %164 : vector<1x32xf32> to vector<16x32xf32>
    %185 = arith.mulf %183, %184 : vector<16x32xf32>
    %186 = vector.broadcast %165 : vector<1x32xf32> to vector<16x32xf32>
    %187 = arith.addf %185, %186 : vector<16x32xf32>
    %188 = arith.truncf %187 : vector<16x32xf32> to vector<16x32xbf16>
    %c0_64 = arith.constant 0 : index
    %c0_65 = arith.constant 0 : index
    %189 = vector.load %arg13[%c0_64, %c0_65] : memref<32x64xbf16, #tpu.memory_space<vmem>>, vector<32x64xbf16>
    %cst_66 = arith.constant dense<0.000000e+00> : vector<16x64xf32>
    %190 = tpu.matmul %188, %189, %cst_66 {dimension_numbers = #tpu.dot_dimension_numbers<[1], [0], [0], [1], [0, 0, 1, 1], [], []>} : vector<16x32xbf16>, vector<32x64xbf16>, vector<16x64xf32> -> vector<16x64xf32>
    %c0_67 = arith.constant 0 : index
    %c0_68 = arith.constant 0 : index
    %191 = vector.load %arg14[%c0_67, %c0_68] : memref<1x64xf32, #tpu.memory_space<vmem>>, vector<1x64xf32>
    %192 = vector.broadcast %191 : vector<1x64xf32> to vector<16x64xf32>
    %193 = arith.addf %190, %192 : vector<16x64xf32>
    %cst_69 = arith.constant 0.000000e+00 : f32
    %194 = vector.broadcast %cst_69 : f32 to vector<16x64xf32>
    %195 = arith.maximumf %193, %194 : vector<16x64xf32>
    %196 = arith.truncf %195 : vector<16x64xf32> to vector<16x64xbf16>
    %c0_70 = arith.constant 0 : index
    %c0_71 = arith.constant 0 : index
    %197 = vector.load %arg15[%c0_70, %c0_71] : memref<64x32xbf16, #tpu.memory_space<vmem>>, vector<64x32xbf16>
    %cst_72 = arith.constant dense<0.000000e+00> : vector<16x32xf32>
    %198 = tpu.matmul %196, %197, %cst_72 {dimension_numbers = #tpu.dot_dimension_numbers<[1], [0], [0], [1], [0, 0, 1, 1], [], []>} : vector<16x64xbf16>, vector<64x32xbf16>, vector<16x32xf32> -> vector<16x32xf32>
    %c0_73 = arith.constant 0 : index
    %c0_74 = arith.constant 0 : index
    %199 = vector.load %arg16[%c0_73, %c0_74] : memref<1x32xf32, #tpu.memory_space<vmem>>, vector<1x32xf32>
    %200 = vector.broadcast %199 : vector<1x32xf32> to vector<16x32xf32>
    %201 = arith.addf %198, %200 : vector<16x32xf32>
    %202 = arith.addf %201, %163 : vector<16x32xf32>
    %c0_75 = arith.constant 0 : index
    %c0_76 = arith.constant 0 : index
    %203 = vector.load %arg17[%c0_75, %c0_76] : memref<16x32xf32, #tpu.memory_space<vmem>>, vector<16x32xf32>
    tpu.vector_store %arg17[%c0_75, %c0_76], %202 {strides = array<i32>} : memref<16x32xf32, #tpu.memory_space<vmem>>, vector<16x32xf32>,
    return
  }
  func.func @transform_0(%arg0: i32, %arg1: memref<4xi32, #tpu.memory_space<smem>>) -> (i32, i32) {
    %c0_i32 = arith.constant 0 : i32
    %c0_i32_0 = arith.constant 0 : i32
    return %arg0, %c0_i32 : i32, i32
  }
  func.func @transform_1(%arg0: i32, %arg1: memref<4xi32, #tpu.memory_space<smem>>) -> (i32, i32) {
    %c0_i32 = arith.constant 0 : i32
    %c0_i32_0 = arith.constant 0 : i32
    %c0_i32_1 = arith.constant 0 : i32
    return %c0_i32, %c0_i32_0 : i32, i32
  }
  func.func @transform_2(%arg0: i32, %arg1: memref<4xi32, #tpu.memory_space<smem>>) -> (i32, i32) {
    %c0_i32 = arith.constant 0 : i32
    %c0_i32_0 = arith.constant 0 : i32
    %c0_i32_1 = arith.constant 0 : i32
    return %c0_i32, %c0_i32_0 : i32, i32
  }
  func.func @transform_3(%arg0: i32, %arg1: memref<4xi32, #tpu.memory_space<smem>>) -> (i32, i32) {
    %c0_i32 = arith.constant 0 : i32
    %c0_i32_0 = arith.constant 0 : i32
    %c0_i32_1 = arith.constant 0 : i32
    return %c0_i32, %c0_i32_0 : i32, i32
  }
  func.func @transform_4(%arg0: i32, %arg1: memref<4xi32, #tpu.memory_space<smem>>) -> (i32, i32) {
    %c0_i32 = arith.constant 0 : i32
    %c0_i32_0 = arith.constant 0 : i32
    %c0_i32_1 = arith.constant 0 : i32
    return %c0_i32, %c0_i32_0 : i32, i32
  }
  func.func @transform_5(%arg0: i32, %arg1: memref<4xi32, #tpu.memory_space<smem>>) -> (i32, i32) {
    %c0_i32 = arith.constant 0 : i32
    %c0_i32_0 = arith.constant 0 : i32
    %c0_i32_1 = arith.constant 0 : i32
    return %c0_i32, %c0_i32_0 : i32, i32
  }
  func.func @transform_6(%arg0: i32, %arg1: memref<4xi32, #tpu.memory_space<smem>>) -> (i32, i32) {
    %c0_i32 = arith.constant 0 : i32
    %c0_i32_0 = arith.constant 0 : i32
    %c0_i32_1 = arith.constant 0 : i32
    return %c0_i32, %c0_i32_0 : i32, i32
  }
  func.func @transform_7(%arg0: i32, %arg1: memref<4xi32, #tpu.memory_space<smem>>) -> (i32, i32) {
    %c0_i32 = arith.constant 0 : i32
    %c0_i32_0 = arith.constant 0 : i32
    %c0_i32_1 = arith.constant 0 : i32
    return %c0_i32, %c0_i32_0 : i32, i32
  }
  func.func @transform_8(%arg0: i32, %arg1: memref<4xi32, #tpu.memory_space<smem>>) -> (i32, i32) {
    %c0_i32 = arith.constant 0 : i32
    %c0_i32_0 = arith.constant 0 : i32
    %c0_i32_1 = arith.constant 0 : i32
    return %c0_i32, %c0_i32_0 : i32, i32
  }
  func.func @transform_9(%arg0: i32, %arg1: memref<4xi32, #tpu.memory_space<smem>>) -> (i32, i32) {
    %c0_i32 = arith.constant 0 : i32
    %c0_i32_0 = arith.constant 0 : i32
    %c0_i32_1 = arith.constant 0 : i32
    return %c0_i32, %c0_i32_0 : i32, i32
  }
  func.func @transform_10(%arg0: i32, %arg1: memref<4xi32, #tpu.memory_space<smem>>) -> (i32, i32) {
    %c0_i32 = arith.constant 0 : i32
    %c0_i32_0 = arith.constant 0 : i32
    %c0_i32_1 = arith.constant 0 : i32
    return %c0_i32, %c0_i32_0 : i32, i32
  }
  func.func @transform_11(%arg0: i32, %arg1: memref<4xi32, #tpu.memory_space<smem>>) -> (i32, i32) {
    %c0_i32 = arith.constant 0 : i32
    %c0_i32_0 = arith.constant 0 : i32
    %c0_i32_1 = arith.constant 0 : i32
    return %c0_i32, %c0_i32_0 : i32, i32
  }
  func.func @transform_12(%arg0: i32, %arg1: memref<4xi32, #tpu.memory_space<smem>>) -> (i32, i32) {
    %c0_i32 = arith.constant 0 : i32
    %c0_i32_0 = arith.constant 0 : i32
    %c0_i32_1 = arith.constant 0 : i32
    return %c0_i32, %c0_i32_0 : i32, i32
  }
  func.func @transform_13(%arg0: i32, %arg1: memref<4xi32, #tpu.memory_space<smem>>) -> (i32, i32) {
    %c0_i32 = arith.constant 0 : i32
    %c0_i32_0 = arith.constant 0 : i32
    %c0_i32_1 = arith.constant 0 : i32
    return %c0_i32, %c0_i32_0 : i32, i32
  }
  func.func @transform_14(%arg0: i32, %arg1: memref<4xi32, #tpu.memory_space<smem>>) -> (i32, i32) {
    %c0_i32 = arith.constant 0 : i32
    %c0_i32_0 = arith.constant 0 : i32
    %c0_i32_1 = arith.constant 0 : i32
    return %c0_i32, %c0_i32_0 : i32, i32
  }
  func.func @transform_15(%arg0: i32, %arg1: memref<4xi32, #tpu.memory_space<smem>>) -> (i32, i32) {
    %c0_i32 = arith.constant 0 : i32
    %c0_i32_0 = arith.constant 0 : i32
    return %arg0, %c0_i32 : i32, i32
  }
}

</mosaic_0001>

<llo_original>
// kernel: tpu_custom_call.1
$region0: #{tpu_custom_call.1}
  #allocation0 [shape = 'u32[]', space=smem, size = 0x4, offset = 0x4, fixed_abs, tag = 'smem constant byte address 0x4 - core index']
  #allocation1 [shape = 'u32[144,128]{1,0:T(1,128)}', space=vmem, size = 0x12000, scoped, tag = 'internal scratch']
  #allocation2 [shape = 'bf16[16,64]{1,0:T(16,128)(2,1)}', space=vmem, size = 0x1000, scoped, tag = 'scratch operand']
  #allocation3 [shape = 's32[1]{0}', space=sflag, size = 0x4, scoped, tag = 'scoped memory for tpu_custom_call.1']
  #allocation4 [shape = 'u8[512]{0}', space=smem, size = 0x200, scoped, tag = 'prefetched SMEM operand 0']
  %s0 = inlined_call_operand.hbm [shape: s32[4], index: 0, kind: input, shape index: {}]
  %s1 = inlined_call_operand.vmem [shape: f32[32,32], index: 1, kind: input, shape index: {}]
  %s2 = inlined_call_operand.vmem [shape: f32[1,32], index: 2, kind: input, shape index: {}]
  %s3 = inlined_call_operand.vmem [shape: f32[1,32], index: 3, kind: input, shape index: {}]
  %s4 = inlined_call_operand.vmem [shape: bf16[32,64], index: 4, kind: input, shape index: {}]
  %s5 = inlined_call_operand.vmem [shape: f32[1,64], index: 5, kind: input, shape index: {}]
  %s6 = inlined_call_operand.vmem [shape: bf16[32,128], index: 6, kind: input, shape index: {}]
  %s7 = inlined_call_operand.vmem [shape: f32[1,128], index: 7, kind: input, shape index: {}]
  %s8 = inlined_call_operand.vmem [shape: bf16[64,32], index: 8, kind: input, shape index: {}]
  %s9 = inlined_call_operand.vmem [shape: f32[1,32], index: 9, kind: input, shape index: {}]
  %s10 = inlined_call_operand.vmem [shape: f32[1,32], index: 10, kind: input, shape index: {}]
  %s11 = inlined_call_operand.vmem [shape: f32[1,32], index: 11, kind: input, shape index: {}]
  %s12 = inlined_call_operand.vmem [shape: bf16[32,64], index: 12, kind: input, shape index: {}]
  %s13 = inlined_call_operand.vmem [shape: f32[1,64], index: 13, kind: input, shape index: {}]
  %s14 = inlined_call_operand.vmem [shape: bf16[64,32], index: 14, kind: input, shape index: {}]
  %s15 = inlined_call_operand.vmem [shape: f32[1,32], index: 15, kind: input, shape index: {}]
  %s16 = inlined_call_operand.hbm [shape: f32[32,32], index: 16, kind: output, shape index: {}]
  %s17 = sld [smem:[#allocation0]]
  $region93: #{tpu_custom_call.1} parent=0
    _
  %s19 = ssub.s32 1, %s17
  %s20 = scalar_select 0, %s19, %s17
  %22 = dma.hbm_to_smem %s0, 16, [#allocation4], [#allocation3]
  %23 = dma.done [#allocation3], 16
  %24 = sfence
  $region1: #{tpu_custom_call.1} parent=0
    #allocation5 [shape = 'u8[16384]{0}', space=vmem, size = 0x4000, scoped, tag = 'output window, operand 0']
    #allocation6 [shape = 's32[2]{0}', space=sflag, size = 0x8, scoped, tag = 'scoped memory for tpu_custom_call.1']
    %25 = vsyncpa [#allocation6], 0
    %s26 = scalar_lea.sflag [#allocation6], 1
    %27 = vsyncpa %s26, 0
    loop: start=0, step=1, limit=4
    $region2: #{tpu_custom_call.1} parent=1 // loop_pre_header
      _
    $region3: #{tpu_custom_call.1} parent=1 // loop_header
      %s29 = sphi 0, %s33
      %p30 = scmp.ge.s32.totalorder %s29, 4
      %s39 = sphi 0, %s41
      %s42 = sphi 0, %s39
      %s43 = sphi 0, %s42
      %s59 = sphi 0, %s43
      %s63 = sphi 0, %s63
      %s65 = sphi 0, %s63
      %s66 = sphi 0, %s65
      %s80 = sphi 0, %s66
      %s84 = sphi 0, %s84
      %s86 = sphi 0, %s84
      %s87 = sphi 0, %s86
      %s101 = sphi 0, %s87
      %s105 = sphi 0, %s105
      %s107 = sphi 0, %s105
      %s108 = sphi 0, %s107
      %s122 = sphi 0, %s108
      %s126 = sphi 0, %s126
      %s128 = sphi 0, %s126
      %s129 = sphi 0, %s128
      %s143 = sphi 0, %s129
      %s147 = sphi 0, %s147
      %s149 = sphi 0, %s147
      %s150 = sphi 0, %s149
      %s164 = sphi 0, %s150
      %s168 = sphi 0, %s168
      %s170 = sphi 0, %s168
      %s171 = sphi 0, %s170
      %s185 = sphi 0, %s171
      %s189 = sphi 0, %s189
      %s191 = sphi 0, %s189
      %s192 = sphi 0, %s191
      %s206 = sphi 0, %s192
      %s210 = sphi 0, %s210
      %s212 = sphi 0, %s210
      %s213 = sphi 0, %s212
      %s227 = sphi 0, %s213
      %s231 = sphi 0, %s231
      %s233 = sphi 0, %s231
      %s234 = sphi 0, %s233
      %s248 = sphi 0, %s234
      %s252 = sphi 0, %s252
      %s254 = sphi 0, %s252
      %s255 = sphi 0, %s254
      %s269 = sphi 0, %s255
      %s273 = sphi 0, %s273
      %s275 = sphi 0, %s273
      %s276 = sphi 0, %s275
      %s290 = sphi 0, %s276
      %s294 = sphi 0, %s294
      %s296 = sphi 0, %s294
      %s297 = sphi 0, %s296
      %s311 = sphi 0, %s297
      %s315 = sphi 0, %s315
      %s317 = sphi 0, %s315
      %s318 = sphi 0, %s317
      %s332 = sphi 0, %s318
      %s336 = sphi 0, %s336
      %s338 = sphi 0, %s336
      %s339 = sphi 0, %s338
      %s353 = sphi 0, %s339
      %s359 = sphi 0, %s361
      %s362 = sphi 0, %s359
      %s363 = sphi 0, %s362
      %s379 = sphi 0, %s363
    $region4: #{tpu_custom_call.1} parent=1 // loop_header_branch
      %32 = sbr.rel (%p30) target = $region8
    $region5: #{tpu_custom_call.1} parent=1 // loop_body
      %s34 = ssub.s32 %s29, 1
      %s35 = ssub.s32 %s29, 2
      %s36 = sadd.s32 %s29, 1
      %s37 = ssub.s32 %s29, %s36
      %p38 = scmp.eq.s32.totalorder %s37, 0
      %s40 = sadd.s32 %s39, 1
      %s41 = scalar_select %p38, %s39, %s40
      %p44 = pneg %p38
      %p45 = scmp.eq.s32.totalorder %s29, 1
      %p46 = por %p44, %p45
      %p47 = scmp.ne.s32.totalorder %s39, %s42
      %p48 = scmp.eq.s32.totalorder %s29, 0
      %p49 = por %p47, %p48
      %p50 = scmp.ne.s32.totalorder %s39, %s42
      %p51 = scmp.eq.s32.totalorder %s34, 1
      %p52 = por %p50, %p51
      %p53 = scmp.ne.s32.totalorder %s42, %s43
      %p54 = scmp.eq.s32.totalorder %s34, 0
      %p55 = por %p53, %p54
      %p56 = scmp.ne.s32.totalorder %s42, %s43
      %p57 = scmp.eq.s32.totalorder %s35, 1
      %p58 = por %p56, %p57
      %p60 = scmp.ne.s32.totalorder %s43, %s59
      %p61 = scmp.eq.s32.totalorder %s35, 0
      %p62 = por %p60, %p61
      %s64 = sadd.s32 %s63, 1
      %p67 = scmp.eq.s32.totalorder %s29, 1
      %p68 = scmp.ne.s32.totalorder %s63, %s65
      %p69 = scmp.eq.s32.totalorder %s29, 0
      %p70 = por %p68, %p69
      %p71 = scmp.ne.s32.totalorder %s63, %s65
      %p72 = scmp.eq.s32.totalorder %s34, 1
      %p73 = por %p71, %p72
      %p74 = scmp.ne.s32.totalorder %s65, %s66
      %p75 = scmp.eq.s32.totalorder %s34, 0
      %p76 = por %p74, %p75
      %p77 = scmp.ne.s32.totalorder %s65, %s66
      %p78 = scmp.eq.s32.totalorder %s35, 1
      %p79 = por %p77, %p78
      %p81 = scmp.ne.s32.totalorder %s66, %s80
      %p82 = scmp.eq.s32.totalorder %s35, 0
      %p83 = por %p81, %p82
      %s85 = sadd.s32 %s84, 1
      %p88 = scmp.eq.s32.totalorder %s29, 1
      %p89 = scmp.ne.s32.totalorder %s84, %s86
      %p90 = scmp.eq.s32.totalorder %s29, 0
      %p91 = por %p89, %p90
      %p92 = scmp.ne.s32.totalorder %s84, %s86
      %p93 = scmp.eq.s32.totalorder %s34, 1
      %p94 = por %p92, %p93
      %p95 = scmp.ne.s32.totalorder %s86, %s87
      %p96 = scmp.eq.s32.totalorder %s34, 0
      %p97 = por %p95, %p96
      %p98 = scmp.ne.s32.totalorder %s86, %s87
      %p99 = scmp.eq.s32.totalorder %s35, 1
      %p100 = por %p98, %p99
      %p102 = scmp.ne.s32.totalorder %s87, %s101
      %p103 = scmp.eq.s32.totalorder %s35, 0
      %p104 = por %p102, %p103
      %s106 = sadd.s32 %s105, 1
      %p109 = scmp.eq.s32.totalorder %s29, 1
      %p110 = scmp.ne.s32.totalorder %s105, %s107
      %p111 = scmp.eq.s32.totalorder %s29, 0
      %p112 = por %p110, %p111
      %p113 = scmp.ne.s32.totalorder %s105, %s107
      %p114 = scmp.eq.s32.totalorder %s34, 1
      %p115 = por %p113, %p114
      %p116 = scmp.ne.s32.totalorder %s107, %s108
      %p117 = scmp.eq.s32.totalorder %s34, 0
      %p118 = por %p116, %p117
      %p119 = scmp.ne.s32.totalorder %s107, %s108
      %p120 = scmp.eq.s32.totalorder %s35, 1
      %p121 = por %p119, %p120
      %p123 = scmp.ne.s32.totalorder %s108, %s122
      %p124 = scmp.eq.s32.totalorder %s35, 0
      %p125 = por %p123, %p124
      %s127 = sadd.s32 %s126, 1
      %p130 = scmp.eq.s32.totalorder %s29, 1
      %p131 = scmp.ne.s32.totalorder %s126, %s128
      %p132 = scmp.eq.s32.totalorder %s29, 0
      %p133 = por %p131, %p132
      %p134 = scmp.ne.s32.totalorder %s126, %s128
      %p135 = scmp.eq.s32.totalorder %s34, 1
      %p136 = por %p134, %p135
      %p137 = scmp.ne.s32.totalorder %s128, %s129
      %p138 = scmp.eq.s32.totalorder %s34, 0
      %p139 = por %p137, %p138
      %p140 = scmp.ne.s32.totalorder %s128, %s129
      %p141 = scmp.eq.s32.totalorder %s35, 1
      %p142 = por %p140, %p141
      %p144 = scmp.ne.s32.totalorder %s129, %s143
      %p145 = scmp.eq.s32.totalorder %s35, 0
      %p146 = por %p144, %p145
      %s148 = sadd.s32 %s147, 1
      %p151 = scmp.eq.s32.totalorder %s29, 1
      %p152 = scmp.ne.s32.totalorder %s147, %s149
      %p153 = scmp.eq.s32.totalorder %s29, 0
      %p154 = por %p152, %p153
      %p155 = scmp.ne.s32.totalorder %s147, %s149
      %p156 = scmp.eq.s32.totalorder %s34, 1
      %p157 = por %p155, %p156
      %p158 = scmp.ne.s32.totalorder %s149, %s150
      %p159 = scmp.eq.s32.totalorder %s34, 0
      %p160 = por %p158, %p159
      %p161 = scmp.ne.s32.totalorder %s149, %s150
      %p162 = scmp.eq.s32.totalorder %s35, 1
      %p163 = por %p161, %p162
      %p165 = scmp.ne.s32.totalorder %s150, %s164
      %p166 = scmp.eq.s32.totalorder %s35, 0
      %p167 = por %p165, %p166
      %s169 = sadd.s32 %s168, 1
      %p172 = scmp.eq.s32.totalorder %s29, 1
      %p173 = scmp.ne.s32.totalorder %s168, %s170
      %p174 = scmp.eq.s32.totalorder %s29, 0
      %p175 = por %p173, %p174
      %p176 = scmp.ne.s32.totalorder %s168, %s170
      %p177 = scmp.eq.s32.totalorder %s34, 1
      %p178 = por %p176, %p177
      %p179 = scmp.ne.s32.totalorder %s170, %s171
      %p180 = scmp.eq.s32.totalorder %s34, 0
      %p181 = por %p179, %p180
      %p182 = scmp.ne.s32.totalorder %s170, %s171
      %p183 = scmp.eq.s32.totalorder %s35, 1
      %p184 = por %p182, %p183
      %p186 = scmp.ne.s32.totalorder %s171, %s185
      %p187 = scmp.eq.s32.totalorder %s35, 0
      %p188 = por %p186, %p187
      %s190 = sadd.s32 %s189, 1
      %p193 = scmp.eq.s32.totalorder %s29, 1
      %p194 = scmp.ne.s32.totalorder %s189, %s191
      %p195 = scmp.eq.s32.totalorder %s29, 0
      %p196 = por %p194, %p195
      %p197 = scmp.ne.s32.totalorder %s189, %s191
      %p198 = scmp.eq.s32.totalorder %s34, 1
      %p199 = por %p197, %p198
      %p200 = scmp.ne.s32.totalorder %s191, %s192
      %p201 = scmp.eq.s32.totalorder %s34, 0
      %p202 = por %p200, %p201
      %p203 = scmp.ne.s32.totalorder %s191, %s192
      %p204 = scmp.eq.s32.totalorder %s35, 1
      %p205 = por %p203, %p204
      %p207 = scmp.ne.s32.totalorder %s192, %s206
      %p208 = scmp.eq.s32.totalorder %s35, 0
      %p209 = por %p207, %p208
      %s211 = sadd.s32 %s210, 1
      %p214 = scmp.eq.s32.totalorder %s29, 1
      %p215 = scmp.ne.s32.totalorder %s210, %s212
      %p216 = scmp.eq.s32.totalorder %s29, 0
      %p217 = por %p215, %p216
      %p218 = scmp.ne.s32.totalorder %s210, %s212
      %p219 = scmp.eq.s32.totalorder %s34, 1
      %p220 = por %p218, %p219
      %p221 = scmp.ne.s32.totalorder %s212, %s213
      %p222 = scmp.eq.s32.totalorder %s34, 0
      %p223 = por %p221, %p222
      %p224 = scmp.ne.s32.totalorder %s212, %s213
      %p225 = scmp.eq.s32.totalorder %s35, 1
      %p226 = por %p224, %p225
      %p228 = scmp.ne.s32.totalorder %s213, %s227
      %p229 = scmp.eq.s32.totalorder %s35, 0
      %p230 = por %p228, %p229
      %s232 = sadd.s32 %s231, 1
      %p235 = scmp.eq.s32.totalorder %s29, 1
      %p236 = scmp.ne.s32.totalorder %s231, %s233
      %p237 = scmp.eq.s32.totalorder %s29, 0
      %p238 = por %p236, %p237
      %p239 = scmp.ne.s32.totalorder %s231, %s233
      %p240 = scmp.eq.s32.totalorder %s34, 1
      %p241 = por %p239, %p240
      %p242 = scmp.ne.s32.totalorder %s233, %s234
      %p243 = scmp.eq.s32.totalorder %s34, 0
      %p244 = por %p242, %p243
      %p245 = scmp.ne.s32.totalorder %s233, %s234
      %p246 = scmp.eq.s32.totalorder %s35, 1
      %p247 = por %p245, %p246
      %p249 = scmp.ne.s32.totalorder %s234, %s248
      %p250 = scmp.eq.s32.totalorder %s35, 0
      %p251 = por %p249, %p250
      %s253 = sadd.s32 %s252, 1
      %p256 = scmp.eq.s32.totalorder %s29, 1
      %p257 = scmp.ne.s32.totalorder %s252, %s254
      %p258 = scmp.eq.s32.totalorder %s29, 0
      %p259 = por %p257, %p258
      %p260 = scmp.ne.s32.totalorder %s252, %s254
      %p261 = scmp.eq.s32.totalorder %s34, 1
      %p262 = por %p260, %p261
      %p263 = scmp.ne.s32.totalorder %s254, %s255
      %p264 = scmp.eq.s32.totalorder %s34, 0
      %p265 = por %p263, %p264
      %p266 = scmp.ne.s32.totalorder %s254, %s255
      %p267 = scmp.eq.s32.totalorder %s35, 1
      %p268 = por %p266, %p267
      %p270 = scmp.ne.s32.totalorder %s255, %s269
      %p271 = scmp.eq.s32.totalorder %s35, 0
      %p272 = por %p270, %p271
      %s274 = sadd.s32 %s273, 1
      %p277 = scmp.eq.s32.totalorder %s29, 1
      %p278 = scmp.ne.s32.totalorder %s273, %s275
      %p279 = scmp.eq.s32.totalorder %s29, 0
      %p280 = por %p278, %p279
      %p281 = scmp.ne.s32.totalorder %s273, %s275
      %p282 = scmp.eq.s32.totalorder %s34, 1
      %p283 = por %p281, %p282
      %p284 = scmp.ne.s32.totalorder %s275, %s276
      %p285 = scmp.eq.s32.totalorder %s34, 0
      %p286 = por %p284, %p285
      %p287 = scmp.ne.s32.totalorder %s275, %s276
      %p288 = scmp.eq.s32.totalorder %s35, 1
      %p289 = por %p287, %p288
      %p291 = scmp.ne.s32.totalorder %s276, %s290
      %p292 = scmp.eq.s32.totalorder %s35, 0
      %p293 = por %p291, %p292
      %s295 = sadd.s32 %s294, 1
      %p298 = scmp.eq.s32.totalorder %s29, 1
      %p299 = scmp.ne.s32.totalorder %s294, %s296
      %p300 = scmp.eq.s32.totalorder %s29, 0
      %p301 = por %p299, %p300
      %p302 = scmp.ne.s32.totalorder %s294, %s296
      %p303 = scmp.eq.s32.totalorder %s34, 1
      %p304 = por %p302, %p303
      %p305 = scmp.ne.s32.totalorder %s296, %s297
      %p306 = scmp.eq.s32.totalorder %s34, 0
      %p307 = por %p305, %p306
      %p308 = scmp.ne.s32.totalorder %s296, %s297
      %p309 = scmp.eq.s32.totalorder %s35, 1
      %p310 = por %p308, %p309
      %p312 = scmp.ne.s32.totalorder %s297, %s311
      %p313 = scmp.eq.s32.totalorder %s35, 0
      %p314 = por %p312, %p313
      %s316 = sadd.s32 %s315, 1
      %p319 = scmp.eq.s32.totalorder %s29, 1
      %p320 = scmp.ne.s32.totalorder %s315, %s317
      %p321 = scmp.eq.s32.totalorder %s29, 0
      %p322 = por %p320, %p321
      %p323 = scmp.ne.s32.totalorder %s315, %s317
      %p324 = scmp.eq.s32.totalorder %s34, 1
      %p325 = por %p323, %p324
      %p326 = scmp.ne.s32.totalorder %s317, %s318
      %p327 = scmp.eq.s32.totalorder %s34, 0
      %p328 = por %p326, %p327
      %p329 = scmp.ne.s32.totalorder %s317, %s318
      %p330 = scmp.eq.s32.totalorder %s35, 1
      %p331 = por %p329, %p330
      %p333 = scmp.ne.s32.totalorder %s318, %s332
      %p334 = scmp.eq.s32.totalorder %s35, 0
      %p335 = por %p333, %p334
      %s337 = sadd.s32 %s336, 1
      %p340 = scmp.eq.s32.totalorder %s29, 1
      %p341 = scmp.ne.s32.totalorder %s336, %s338
      %p342 = scmp.eq.s32.totalorder %s29, 0
      %p343 = por %p341, %p342
      %p344 = scmp.ne.s32.totalorder %s336, %s338
      %p345 = scmp.eq.s32.totalorder %s34, 1
      %p346 = por %p344, %p345
      %p347 = scmp.ne.s32.totalorder %s338, %s339
      %p348 = scmp.eq.s32.totalorder %s34, 0
      %p349 = por %p347, %p348
      %p350 = scmp.ne.s32.totalorder %s338, %s339
      %p351 = scmp.eq.s32.totalorder %s35, 1
      %p352 = por %p350, %p351
      %p354 = scmp.ne.s32.totalorder %s339, %s353
      %p355 = scmp.eq.s32.totalorder %s35, 0
      %p356 = por %p354, %p355
      %s357 = ssub.s32 %s29, %s36
      %p358 = scmp.eq.s32.totalorder %s357, 0
      %s360 = sadd.s32 %s359, 1
      %s361 = scalar_select %p358, %s359, %s360
      %p364 = pneg %p358
      %p365 = scmp.eq.s32.totalorder %s29, 1
      %p366 = por %p364, %p365
      %p367 = scmp.ne.s32.totalorder %s359, %s362
      %p368 = scmp.eq.s32.totalorder %s29, 0
      %p369 = por %p367, %p368
      %p370 = scmp.ne.s32.totalorder %s359, %s362
      %p371 = scmp.eq.s32.totalorder %s34, 1
      %p372 = por %p370, %p371
      %p373 = scmp.ne.s32.totalorder %s362, %s363
      %p374 = scmp.eq.s32.totalorder %s34, 0
      %p375 = por %p373, %p374
      %p376 = scmp.ne.s32.totalorder %s362, %s363
      %p377 = scmp.eq.s32.totalorder %s35, 1
      %p378 = por %p376, %p377
      %p380 = scmp.ne.s32.totalorder %s363, %s379
      %p381 = scmp.eq.s32.totalorder %s35, 0
      %p382 = por %p380, %p381
      %p383 = scmp.le.s32.totalorder 1, %s29
      %p384 = scmp.lt.s32.totalorder %s29, 3
      %p385 = pnand %p383, %p384
      %p386 = pneg %p385
      // Predicated region
      $region9: #{tpu_custom_call.1} parent=5 // pred_check
        _
      $region10: #{tpu_custom_call.1} parent=5 // pred_check_branch
        %388 = sbr.rel (%p385) target = $region12
      $region11: #{tpu_custom_call.1} parent=5 // pred_region
        %s389 = ssub.s32 %s29, 1
        // Predicated region
        $region13: #{tpu_custom_call.1} parent=11 // pred_check
          %p390 = pneg %p76
        $region14: #{tpu_custom_call.1} parent=11 // pred_check_branch
          %392 = sbr.rel (%p390) target = $region16
        $region15: #{tpu_custom_call.1} parent=11 // pred_region
          _
        $region16: #{tpu_custom_call.1} parent=11 // pred_fallthru
          _
        // Predicated region
        $region17: #{tpu_custom_call.1} parent=11 // pred_check
          %p393 = pneg %p97
        $region18: #{tpu_custom_call.1} parent=11 // pred_check_branch
          %395 = sbr.rel (%p393) target = $region20
        $region19: #{tpu_custom_call.1} parent=11 // pred_region
          _
        $region20: #{tpu_custom_call.1} parent=11 // pred_fallthru
          _
        // Predicated region
        $region21: #{tpu_custom_call.1} parent=11 // pred_check
          %p396 = pneg %p118
        $region22: #{tpu_custom_call.1} parent=11 // pred_check_branch
          %398 = sbr.rel (%p396) target = $region24
        $region23: #{tpu_custom_call.1} parent=11 // pred_region
          _
        $region24: #{tpu_custom_call.1} parent=11 // pred_fallthru
          _
        // Predicated region
        $region25: #{tpu_custom_call.1} parent=11 // pred_check
          %p399 = pneg %p139
        $region26: #{tpu_custom_call.1} parent=11 // pred_check_branch
          %401 = sbr.rel (%p399) target = $region28
        $region27: #{tpu_custom_call.1} parent=11 // pred_region
          _
        $region28: #{tpu_custom_call.1} parent=11 // pred_fallthru
          _
        // Predicated region
        $region29: #{tpu_custom_call.1} parent=11 // pred_check
          %p402 = pneg %p160
        $region30: #{tpu_custom_call.1} parent=11 // pred_check_branch
          %404 = sbr.rel (%p402) target = $region32
        $region31: #{tpu_custom_call.1} parent=11 // pred_region
          _
        $region32: #{tpu_custom_call.1} parent=11 // pred_fallthru
          _
        // Predicated region
        $region33: #{tpu_custom_call.1} parent=11 // pred_check
          %p405 = pneg %p181
        $region34: #{tpu_custom_call.1} parent=11 // pred_check_branch
          %407 = sbr.rel (%p405) target = $region36
        $region35: #{tpu_custom_call.1} parent=11 // pred_region
          _
        $region36: #{tpu_custom_call.1} parent=11 // pred_fallthru
          _
        // Predicated region
        $region37: #{tpu_custom_call.1} parent=11 // pred_check
          %p408 = pneg %p202
        $region38: #{tpu_custom_call.1} parent=11 // pred_check_branch
          %410 = sbr.rel (%p408) target = $region40
        $region39: #{tpu_custom_call.1} parent=11 // pred_region
          _
        $region40: #{tpu_custom_call.1} parent=11 // pred_fallthru
          _
        // Predicated region
        $region41: #{tpu_custom_call.1} parent=11 // pred_check
          %p411 = pneg %p223
        $region42: #{tpu_custom_call.1} parent=11 // pred_check_branch
          %413 = sbr.rel (%p411) target = $region44
        $region43: #{tpu_custom_call.1} parent=11 // pred_region
          _
        $region44: #{tpu_custom_call.1} parent=11 // pred_fallthru
          _
        // Predicated region
        $region45: #{tpu_custom_call.1} parent=11 // pred_check
          %p414 = pneg %p244
        $region46: #{tpu_custom_call.1} parent=11 // pred_check_branch
          %416 = sbr.rel (%p414) target = $region48
        $region47: #{tpu_custom_call.1} parent=11 // pred_region
          _
        $region48: #{tpu_custom_call.1} parent=11 // pred_fallthru
          _
        // Predicated region
        $region49: #{tpu_custom_call.1} parent=11 // pred_check
          %p417 = pneg %p265
        $region50: #{tpu_custom_call.1} parent=11 // pred_check_branch
          %419 = sbr.rel (%p417) target = $region52
        $region51: #{tpu_custom_call.1} parent=11 // pred_region
          _
        $region52: #{tpu_custom_call.1} parent=11 // pred_fallthru
          _
        // Predicated region
        $region53: #{tpu_custom_call.1} parent=11 // pred_check
          %p420 = pneg %p286
        $region54: #{tpu_custom_call.1} parent=11 // pred_check_branch
          %422 = sbr.rel (%p420) target = $region56
        $region55: #{tpu_custom_call.1} parent=11 // pred_region
          _
        $region56: #{tpu_custom_call.1} parent=11 // pred_fallthru
          _
        // Predicated region
        $region57: #{tpu_custom_call.1} parent=11 // pred_check
          %p423 = pneg %p307
        $region58: #{tpu_custom_call.1} parent=11 // pred_check_branch
          %425 = sbr.rel (%p423) target = $region60
        $region59: #{tpu_custom_call.1} parent=11 // pred_region
          _
        $region60: #{tpu_custom_call.1} parent=11 // pred_fallthru
          _
        // Predicated region
        $region61: #{tpu_custom_call.1} parent=11 // pred_check
          %p426 = pneg %p328
        $region62: #{tpu_custom_call.1} parent=11 // pred_check_branch
          %428 = sbr.rel (%p426) target = $region64
        $region63: #{tpu_custom_call.1} parent=11 // pred_region
          _
        $region64: #{tpu_custom_call.1} parent=11 // pred_fallthru
          _
        // Predicated region
        $region65: #{tpu_custom_call.1} parent=11 // pred_check
          %p429 = pneg %p349
        $region66: #{tpu_custom_call.1} parent=11 // pred_check_branch
          %431 = sbr.rel (%p429) target = $region68
        $region67: #{tpu_custom_call.1} parent=11 // pred_region
          _
        $region68: #{tpu_custom_call.1} parent=11 // pred_fallthru
          _
      $region12: #{tpu_custom_call.1} parent=5 // pred_fallthru
        _
      %p432 = scmp.lt.s32.totalorder %s29, 2
      // Predicated region
      $region69: #{tpu_custom_call.1} parent=5 // pred_check
        %p433 = pneg %p432
      $region70: #{tpu_custom_call.1} parent=5 // pred_check_branch
        %435 = sbr.rel (%p433) target = $region72
      $region71: #{tpu_custom_call.1} parent=5 // pred_region
        // Predicated region
        $region73: #{tpu_custom_call.1} parent=71 // pred_check
          %p436 = pneg %p49
        $region74: #{tpu_custom_call.1} parent=71 // pred_check_branch
          %438 = sbr.rel (%p436) target = $region76
        $region75: #{tpu_custom_call.1} parent=71 // pred_region
          %s439 = smul.u32 2, %s29
          %p440 = scmp.lt.s32.totalorder %s439, 3
          %s441 = scalar_select %p440, %s439, 3
          %s442 = smul.addr %s441, 8
          %s443 = scalar_lea.vmem %s1, %s442
          %s444 = smul.u32 2, %s29
        $region76: #{tpu_custom_call.1} parent=71 // pred_fallthru
          _
      $region72: #{tpu_custom_call.1} parent=5 // pred_fallthru
        _
      %p445 = scmp.le.s32.totalorder 1, %s29
      %p446 = scmp.lt.s32.totalorder %s29, 3
      %p447 = pnand %p445, %p446
      %p448 = pneg %p447
      // Predicated region
      $region77: #{tpu_custom_call.1} parent=5 // pred_check
        _
      $region78: #{tpu_custom_call.1} parent=5 // pred_check_branch
        %450 = sbr.rel (%p447) target = $region80
      $region79: #{tpu_custom_call.1} parent=5 // pred_region
        %s451 = ssub.s32 %s29, 1
        %s452 = smul.u32 2, %s34
        %p453 = scmp.lt.s32.totalorder %s452, 3
        %s454 = scalar_select %p453, %s452, 3
        %s455 = smul.addr %s454, 8
        %s456 = scalar_lea.vmem %s1, %s455
        %p457 = pneg %p55
        %p458 = pneg %p52
        %p459 = pneg %p76
        %p460 = pneg %p73
        %p461 = pneg %p97
        %p462 = pneg %p94
        %p463 = pneg %p118
        %p464 = pneg %p115
        %p465 = pneg %p139
        %p466 = pneg %p136
        %p467 = pneg %p160
        %p468 = pneg %p157
        %p469 = pneg %p181
        %p470 = pneg %p178
        %p471 = pneg %p202
        %p472 = pneg %p199
        %p473 = pneg %p223
        %p474 = pneg %p220
        %p475 = pneg %p244
        %p476 = pneg %p241
        %p477 = pneg %p265
        %p478 = pneg %p262
        %p479 = pneg %p286
        %p480 = pneg %p283
        %p481 = pneg %p307
        %p482 = pneg %p304
        %p483 = pneg %p328
        %p484 = pneg %p325
        %p485 = pneg %p349
        %p486 = pneg %p346
        %p487 = pneg %p375
        %p488 = pneg %p372
        %s489 = sand.u32 %s362, 1
        %s490 = scalar_lea.sflag [#allocation6], %s489
        %s491 = sand.u32 %s362, 1
        %s492 = smul.addr %s491, 16
        %s493 = scalar_lea.vmem [#allocation5], %s492
        %s494 = smul.u32 2, %s34
        %p495 = scmp.lt.s32.totalorder %s494, 3
        %s496 = scalar_select %p495, %s494, 3
        %s497 = smul.addr %s496, 8
        %s498 = scalar_lea.vmem %s1, %s497
        %s499 = smul.u32 2, %s34
        %s500 = smul.u32 2, %s34
        %s502 = smul.u32 %s34, 2
        %v503 = vld [vmem:[%s498] sm:$0xff]
        %v504 = vld [vmem:[%s498 + $0x8] sm:$0xff]
        %v505 = vlaneseq
        %v506 = vand.u32 %v505, 127
        %s507 = sld [smem:[#allocation4 + %s502]]
        %v508 = vstv %s507
        %s509 = sadd.s32 %s502, 1
        %s510 = sld [smem:[#allocation4 + %s509]]
        %v511 = vstv %s510
        %vm512 = vcmp.lt.s32.totalorder %v506, %v508
        %vm513 = vcmp.lt.s32.totalorder %v506, %v511
        %v514 = vld [vmem:[%s2] sm:$0x1]
        %v515 = vld [vmem:[%s3] sm:$0x1]
        %vm516 = vcmask 261120
        %v517 = vsel %vm516, %v503, 0.0
        %518 = vadd.xlane.f32.xlu0 %v517
        %v519 = vpop.xlane.xlu0 %518
        %v520 = vsel %vm516, %v504, 0.0
        %521 = vadd.xlane.f32.xlu0 %v520
        %v522 = vpop.xlane.xlu0 %521
        %v523 = vrcp.pop 32.0
        %v524 = vmul.f32 %v519, %v523
        %v525 = vmul.f32 %v522, %v523
        %v526 = vsub.f32 %v503, %v524
        %v527 = vsub.f32 %v504, %v525
        %v528 = vmul.f32 %v526, %v526
        %v529 = vmul.f32 %v527, %v527
        %v530 = vsel %vm516, %v528, 0.0
        %531 = vadd.xlane.f32.xlu0 %v530
        %v532 = vpop.xlane.xlu0 %531
        %v533 = vsel %vm516, %v529, 0.0
        %534 = vadd.xlane.f32.xlu0 %v533
        %v535 = vpop.xlane.xlu0 %534
        %v536 = vmul.f32 %v532, %v523
        %v537 = vmul.f32 %v535, %v523
        %v538 = vadd.f32 %v536, 1e-05
        %v539 = vadd.f32 %v537, 1e-05
        %v540 = vrsqrt.pop %v538
        %v541 = vrsqrt.pop %v539
        %v542 = vmul.f32 %v526, %v540
        %v543 = vmul.f32 %v527, %v541
        %v545 = vlaneseq
        %v546 = vshrl.u32 %v545, 7
        %v547 = vsub.s32 0, %v546
        %v548 = vrot.slane %v514, %v547
        %v550 = vmul.f32 %v542, %v548
        %v551 = vmul.f32 %v543, %v548
        %v553 = vlaneseq
        %v554 = vshrl.u32 %v553, 7
        %v555 = vsub.s32 0, %v554
        %v556 = vrot.slane %v515, %v555
        %v558 = vadd.f32 %v550, %v556
        %v559 = vadd.f32 %v551, %v556
        %v560 = vpack.c.bf16 %v559, %v558
        %v561 = vld [vmem:[%s4] sm:$0xf]
        %v562 = vld [vmem:[%s4 + $0x4] sm:$0xf]
        %v563 = vld [vmem:[%s4 + $0x8] sm:$0xf]
        %v564 = vld [vmem:[%s4 + $0xc] sm:$0xf]
        %v565 = vld [vmem:[%s5] sm:$0x1]
        %v567 = vlaneseq
        %v568 = vshrl.u32 %v567, 7
        %v569 = vsub.s32 0, %v568
        %v570 = vrot.slane %v565, %v569
        %v576 = vunpack.c.l.b16 %v561
        %v577 = vunpack.c.l.b16 %v562
        %v578 = vunpack.c.l.b16 %v563
        %v579 = vunpack.c.l.b16 %v564
        %v580 = vpack.c.b16 %v577, %v576
        %v581 = vpack.c.b16 %v579, %v578
        %v585 = vsel %vm516, %v560, 0
        %587 = vmatprep.subr.bf16.mxu0 0
        %588 = vmatpush1.bf16.msra.mxu0 %v580
        %589 = vmatprep.subr.bf16.mxu0 0
        %590 = vmatpush1.bf16.msra.mxu0 %v581
        %591 = vmatprep.subr.bf16.mxu0 0
        %592 = vmatpush1.bf16.msra.mxu0 0
        %593 = vmatprep.subr.bf16.mxu0 0
        %594 = vmatpush1.bf16.msra.mxu0 0
        %595 = vmatprep.subr.bf16.mxu0 0
        %596 = vmatpush1.bf16.msra.mxu0 0
        %597 = vmatprep.subr.bf16.mxu0 0
        %598 = vmatpush1.bf16.msra.mxu0 0
        %599 = vmatprep.subr.bf16.mxu0 0
        %600 = vmatpush1.bf16.msra.mxu0 0
        %601 = vmatprep.subr.bf16.mxu0 0
        %602 = vmatpush1.bf16.msra.mxu0 0
        %603 = vmatprep.subr.bf16.mxu0 0
        %604 = vmatpush1.bf16.msra.mxu0 0
        %605 = vmatprep.subr.bf16.mxu0 0
        %606 = vmatpush1.bf16.msra.mxu0 0
        %607 = vmatprep.subr.bf16.mxu0 0
        %608 = vmatpush1.bf16.msra.mxu0 0
        %609 = vmatprep.subr.bf16.mxu0 0
        %610 = vmatpush1.bf16.msra.mxu0 0
        %611 = vmatprep.subr.bf16.mxu0 0
        %612 = vmatpush1.bf16.msra.mxu0 0
        %613 = vmatprep.subr.bf16.mxu0 0
        %614 = vmatpush1.bf16.msra.mxu0 0
        %615 = vmatprep.subr.bf16.mxu0 0
        %616 = vmatpush1.bf16.msra.mxu0 0
        %617 = vmatprep.subr.bf16.mxu0 0
        %618 = vmatpush1.bf16.msra.mxu0 0
        %619 = vmatprep.mubr.bf16.mxu0 0
        %620 = vmatmul.mubr.bf16.gmra.mrb[0].mxu0 %v585
        %v621 = vpop.f32.mrb[0].mxu0
        %v622 = vadd.f32 %v570, %v621
        %v623 = vpop.f32.mrb[0].mxu0
        %v624 = vpop.f32.mrb[0].mxu0
        %v625 = vadd.f32 %v570, %v624
        %v626 = vpop.f32.mrb[0].mxu0
        %627 = vdwg.mxu0
        %v628 = vld [vmem:[%s6] sm:$0xf]
        %v629 = vld [vmem:[%s6 + $0x4] sm:$0xf]
        %v630 = vld [vmem:[%s6 + $0x8] sm:$0xf]
        %v631 = vld [vmem:[%s6 + $0xc] sm:$0xf]
        %v632 = vld [vmem:[%s7] sm:$0x1]
        %v634 = vlaneseq
        %v635 = vshrl.u32 %v634, 7
        %v636 = vsub.s32 0, %v635
        %v637 = vrot.slane %v632, %v636
        %v643 = vunpack.c.l.b16 %v628
        %v644 = vunpack.c.l.b16 %v629
        %v645 = vunpack.c.l.b16 %v630
        %v646 = vunpack.c.l.b16 %v631
        %v647 = vpack.c.b16 %v644, %v643
        %v648 = vpack.c.b16 %v646, %v645
        %651 = vmatprep.subr.bf16.mxu0 0
        %652 = vmatpush1.bf16.msra.mxu0 %v647
        %653 = vmatprep.subr.bf16.mxu0 0
        %654 = vmatpush1.bf16.msra.mxu0 %v648
        %655 = vmatprep.subr.bf16.mxu0 0
        %656 = vmatpush1.bf16.msra.mxu0 0
        %657 = vmatprep.subr.bf16.mxu0 0
        %658 = vmatpush1.bf16.msra.mxu0 0
        %659 = vmatprep.subr.bf16.mxu0 0
        %660 = vmatpush1.bf16.msra.mxu0 0
        %661 = vmatprep.subr.bf16.mxu0 0
        %662 = vmatpush1.bf16.msra.mxu0 0
        %663 = vmatprep.subr.bf16.mxu0 0
        %664 = vmatpush1.bf16.msra.mxu0 0
        %665 = vmatprep.subr.bf16.mxu0 0
        %666 = vmatpush1.bf16.msra.mxu0 0
        %667 = vmatprep.subr.bf16.mxu0 0
        %668 = vmatpush1.bf16.msra.mxu0 0
        %669 = vmatprep.subr.bf16.mxu0 0
        %670 = vmatpush1.bf16.msra.mxu0 0
        %671 = vmatprep.subr.bf16.mxu0 0
        %672 = vmatpush1.bf16.msra.mxu0 0
        %673 = vmatprep.subr.bf16.mxu0 0
        %674 = vmatpush1.bf16.msra.mxu0 0
        %675 = vmatprep.subr.bf16.mxu0 0
        %676 = vmatpush1.bf16.msra.mxu0 0
        %677 = vmatprep.subr.bf16.mxu0 0
        %678 = vmatpush1.bf16.msra.mxu0 0
        %679 = vmatprep.subr.bf16.mxu0 0
        %680 = vmatpush1.bf16.msra.mxu0 0
        %681 = vmatprep.subr.bf16.mxu0 0
        %682 = vmatpush1.bf16.msra.mxu0 0
        %683 = vmatprep.mubr.bf16.mxu0 0
        %684 = vmatmul.mubr.bf16.gmra.mrb[0].mxu0 %v585
        %v685 = vpop.f32.mrb[0].mxu0
        %v686 = vadd.f32 %v637, %v685
        %v687 = vpop.f32.mrb[0].mxu0
        %v688 = vpop.f32.mrb[0].mxu0
        %v689 = vadd.f32 %v637, %v688
        %v690 = vpop.f32.mrb[0].mxu0
        %691 = vdwg.mxu0
        %v692 = vmul.f32 %v622, 0.25
        %v693 = vmul.f32 %v625, 0.25
        %v694 = vpack.c.bf16 %v692, %v692
        %v695 = vpack.c.bf16 %v693, %v693
        %v696 = vpack.c.bf16 %v686, %v686
        %v697 = vpack.c.bf16 %v689, %v689
        %vm698 = vcmask 130048
        %v700 = vsel %vm698, %v694, 0
        %v703 = vsel %vm698, %v696, 0
        %705 = vmatprep.subr.bf16.mxu0 0
        %706 = vmatpush1.bf16.xpose.msra.mxu0 %v703
        %707 = vmatprep.subr.bf16.mxu0 0
        %708 = vmatpush1.bf16.xpose.msra.mxu0 0
        %709 = vmatprep.subr.bf16.mxu0 0
        %710 = vmatpush1.bf16.xpose.msra.mxu0 0
        %711 = vmatprep.subr.bf16.mxu0 0
        %712 = vmatpush1.bf16.xpose.msra.mxu0 0
        %713 = vmatprep.subr.bf16.mxu0 0
        %714 = vmatpush1.bf16.xpose.msra.mxu0 0
        %715 = vmatprep.subr.bf16.mxu0 0
        %716 = vmatpush1.bf16.xpose.msra.mxu0 0
        %717 = vmatprep.subr.bf16.mxu0 0
        %718 = vmatpush1.bf16.xpose.msra.mxu0 0
        %719 = vmatprep.subr.bf16.mxu0 0
        %720 = vmatpush1.bf16.xpose.msra.mxu0 0
        %721 = vmatprep.subr.bf16.mxu0 0
        %722 = vmatpush1.bf16.xpose.msra.mxu0 0
        %723 = vmatprep.subr.bf16.mxu0 0
        %724 = vmatpush1.bf16.xpose.msra.mxu0 0
        %725 = vmatprep.subr.bf16.mxu0 0
        %726 = vmatpush1.bf16.xpose.msra.mxu0 0
        %727 = vmatprep.subr.bf16.mxu0 0
        %728 = vmatpush1.bf16.xpose.msra.mxu0 0
        %729 = vmatprep.subr.bf16.mxu0 0
        %730 = vmatpush1.bf16.xpose.msra.mxu0 0
        %731 = vmatprep.subr.bf16.mxu0 0
        %732 = vmatpush1.bf16.xpose.msra.mxu0 0
        %733 = vmatprep.subr.bf16.mxu0 0
        %734 = vmatpush1.bf16.xpose.msra.mxu0 0
        %735 = vmatprep.subr.bf16.mxu0 0
        %736 = vmatpush1.bf16.xpose.msra.mxu0 0
        %737 = vmatprep.mubr.bf16.mxu0 0
        %738 = vmatmul.mubr.bf16.gmra.mrb[0].mxu0 %v700
        %v739 = vpop.f32.mrb[0].mxu0
        %v740 = vadd.f32 0.0, %v739
        %v741 = vpop.f32.mrb[0].mxu0
        %v742 = vpop.f32.mrb[0].mxu0
        %v743 = vpop.f32.mrb[0].mxu0
        %744 = vdwg.mxu0
        %v746 = vsel %vm698, %v695, 0
        %v749 = vsel %vm698, %v697, 0
        %751 = vmatprep.subr.bf16.mxu0 0
        %752 = vmatpush1.bf16.xpose.msra.mxu0 %v749
        %753 = vmatprep.subr.bf16.mxu0 0
        %754 = vmatpush1.bf16.xpose.msra.mxu0 0
        %755 = vmatprep.subr.bf16.mxu0 0
        %756 = vmatpush1.bf16.xpose.msra.mxu0 0
        %757 = vmatprep.subr.bf16.mxu0 0
        %758 = vmatpush1.bf16.xpose.msra.mxu0 0
        %759 = vmatprep.subr.bf16.mxu0 0
        %760 = vmatpush1.bf16.xpose.msra.mxu0 0
        %761 = vmatprep.subr.bf16.mxu0 0
        %762 = vmatpush1.bf16.xpose.msra.mxu0 0
        %763 = vmatprep.subr.bf16.mxu0 0
        %764 = vmatpush1.bf16.xpose.msra.mxu0 0
        %765 = vmatprep.subr.bf16.mxu0 0
        %766 = vmatpush1.bf16.xpose.msra.mxu0 0
        %767 = vmatprep.subr.bf16.mxu0 0
        %768 = vmatpush1.bf16.xpose.msra.mxu0 0
        %769 = vmatprep.subr.bf16.mxu0 0
        %770 = vmatpush1.bf16.xpose.msra.mxu0 0
        %771 = vmatprep.subr.bf16.mxu0 0
        %772 = vmatpush1.bf16.xpose.msra.mxu0 0
        %773 = vmatprep.subr.bf16.mxu0 0
        %774 = vmatpush1.bf16.xpose.msra.mxu0 0
        %775 = vmatprep.subr.bf16.mxu0 0
        %776 = vmatpush1.bf16.xpose.msra.mxu0 0
        %777 = vmatprep.subr.bf16.mxu0 0
        %778 = vmatpush1.bf16.xpose.msra.mxu0 0
        %779 = vmatprep.subr.bf16.mxu0 0
        %780 = vmatpush1.bf16.xpose.msra.mxu0 0
        %781 = vmatprep.subr.bf16.mxu0 0
        %782 = vmatpush1.bf16.xpose.msra.mxu0 0
        %783 = vmatprep.mubr.bf16.mxu0 0
        %784 = vmatmul.mubr.bf16.gmra.mrb[0].mxu0 %v746
        %v785 = vpop.f32.mrb[0].mxu0
        %v786 = vadd.f32 0.0, %v785
        %v787 = vpop.f32.mrb[0].mxu0
        %v788 = vpop.f32.mrb[0].mxu0
        %v789 = vpop.f32.mrb[0].mxu0
        %790 = vdwg.mxu0
        %v791 = vsel %vm512, 1, 0
        %v792 = vsel %vm513, 1, 0
        %vm793 = vcmp.eq.s32.totalorder %v791, 1
        %vm794 = vcmp.eq.s32.totalorder %v792, 1
        %v795 = vsel %vm793, %v740, -inf
        %v796 = vsel %vm794, %v786, -inf
        %vm797 = vcmask 64512
        %v798 = vsel %vm797, %v795, -inf
        %799 = vmax.xlane.f32.xlu0 %v798
        %v800 = vpop.xlane.xlu0 %799
        %v801 = vsel %vm797, %v796, -inf
        %802 = vmax.xlane.f32.xlu0 %v801
        %v803 = vpop.xlane.xlu0 %802
        %v804 = vsub.f32 %v795, %v800
        %v805 = vsub.f32 %v796, %v803
        %v806 = vmul.f32 %v804, 1.442695
        %v807 = vpow.pop %v806
        %v808 = vmul.f32 %v805, 1.442695
        %v809 = vpow.pop %v808
        %v810 = vsel %vm797, %v807, 0.0
        %811 = vadd.xlane.f32.xlu0 %v810
        %v812 = vpop.xlane.xlu0 %811
        %v813 = vsel %vm797, %v809, 0.0
        %814 = vadd.xlane.f32.xlu0 %v813
        %v815 = vpop.xlane.xlu0 %814
        %v816 = vrcp.pop %v812
        %v817 = vrcp.pop %v815
        %v818 = vmul.f32 %v807, %v816
        %v819 = vmul.f32 %v809, %v817
        %v820 = vpack.c.bf16 %v818, %v818
        %v821 = vpack.c.bf16 %v819, %v819
        %823 = vrot.lane.b32.xlu0 %v696, 64
        %v824 = vpop.permute.xlu0 %823
        %v826 = vsel %vm797, %v820, 0
        %vm828 = vcmask 1043456
        %v830 = vsel %vm828, %v824, 0
        %832 = vmatprep.subr.bf16.mxu0 0
        %833 = vmatpush1.bf16.msra.mxu0 %v830
        %834 = vmatprep.subr.bf16.mxu0 0
        %835 = vmatpush1.bf16.msra.mxu0 0
        %836 = vmatprep.subr.bf16.mxu0 0
        %837 = vmatpush1.bf16.msra.mxu0 0
        %838 = vmatprep.subr.bf16.mxu0 0
        %839 = vmatpush1.bf16.msra.mxu0 0
        %840 = vmatprep.subr.bf16.mxu0 0
        %841 = vmatpush1.bf16.msra.mxu0 0
        %842 = vmatprep.subr.bf16.mxu0 0
        %843 = vmatpush1.bf16.msra.mxu0 0
        %844 = vmatprep.subr.bf16.mxu0 0
        %845 = vmatpush1.bf16.msra.mxu0 0
        %846 = vmatprep.subr.bf16.mxu0 0
        %847 = vmatpush1.bf16.msra.mxu0 0
        %848 = vmatprep.subr.bf16.mxu0 0
        %849 = vmatpush1.bf16.msra.mxu0 0
        %850 = vmatprep.subr.bf16.mxu0 0
        %851 = vmatpush1.bf16.msra.mxu0 0
        %852 = vmatprep.subr.bf16.mxu0 0
        %853 = vmatpush1.bf16.msra.mxu0 0
        %854 = vmatprep.subr.bf16.mxu0 0
        %855 = vmatpush1.bf16.msra.mxu0 0
        %856 = vmatprep.subr.bf16.mxu0 0
        %857 = vmatpush1.bf16.msra.mxu0 0
        %858 = vmatprep.subr.bf16.mxu0 0
        %859 = vmatpush1.bf16.msra.mxu0 0
        %860 = vmatprep.subr.bf16.mxu0 0
        %861 = vmatpush1.bf16.msra.mxu0 0
        %862 = vmatprep.subr.bf16.mxu0 0
        %863 = vmatpush1.bf16.msra.mxu0 0
        %864 = vmatprep.mubr.bf16.mxu0 0
        %865 = vmatmul.mubr.bf16.gmra.mrb[0].mxu0 %v826
        %v866 = vpop.f32.mrb[0].mxu0
        %v867 = vadd.f32 0.0, %v866
        %v868 = vpop.f32.mrb[0].mxu0
        %v869 = vpop.f32.mrb[0].mxu0
        %v870 = vpop.f32.mrb[0].mxu0
        %871 = vdwg.mxu0
        %873 = vrot.lane.b32.xlu0 %v697, 64
        %v874 = vpop.permute.xlu0 %873
        %v876 = vsel %vm797, %v821, 0
        %v879 = vsel %vm828, %v874, 0
        %881 = vmatprep.subr.bf16.mxu0 0
        %882 = vmatpush1.bf16.msra.mxu0 %v879
        %883 = vmatprep.subr.bf16.mxu0 0
        %884 = vmatpush1.bf16.msra.mxu0 0
        %885 = vmatprep.subr.bf16.mxu0 0
        %886 = vmatpush1.bf16.msra.mxu0 0
        %887 = vmatprep.subr.bf16.mxu0 0
        %888 = vmatpush1.bf16.msra.mxu0 0
        %889 = vmatprep.subr.bf16.mxu0 0
        %890 = vmatpush1.bf16.msra.mxu0 0
        %891 = vmatprep.subr.bf16.mxu0 0
        %892 = vmatpush1.bf16.msra.mxu0 0
        %893 = vmatprep.subr.bf16.mxu0 0
        %894 = vmatpush1.bf16.msra.mxu0 0
        %895 = vmatprep.subr.bf16.mxu0 0
        %896 = vmatpush1.bf16.msra.mxu0 0
        %897 = vmatprep.subr.bf16.mxu0 0
        %898 = vmatpush1.bf16.msra.mxu0 0
        %899 = vmatprep.subr.bf16.mxu0 0
        %900 = vmatpush1.bf16.msra.mxu0 0
        %901 = vmatprep.subr.bf16.mxu0 0
        %902 = vmatpush1.bf16.msra.mxu0 0
        %903 = vmatprep.subr.bf16.mxu0 0
        %904 = vmatpush1.bf16.msra.mxu0 0
        %905 = vmatprep.subr.bf16.mxu0 0
        %906 = vmatpush1.bf16.msra.mxu0 0
        %907 = vmatprep.subr.bf16.mxu0 0
        %908 = vmatpush1.bf16.msra.mxu0 0
        %909 = vmatprep.subr.bf16.mxu0 0
        %910 = vmatpush1.bf16.msra.mxu0 0
        %911 = vmatprep.subr.bf16.mxu0 0
        %912 = vmatpush1.bf16.msra.mxu0 0
        %913 = vmatprep.mubr.bf16.mxu0 0
        %914 = vmatmul.mubr.bf16.gmra.mrb[0].mxu0 %v876
        %v915 = vpop.f32.mrb[0].mxu0
        %v916 = vadd.f32 0.0, %v915
        %v917 = vpop.f32.mrb[0].mxu0
        %v918 = vpop.f32.mrb[0].mxu0
        %v919 = vpop.f32.mrb[0].mxu0
        %920 = vdwg.mxu0
        %v921 = vpack.c.bf16 %v916, %v867
        %922 = vst.msk [vmem:[#allocation2] sm:$0xff] %vm698, %v921
        %924 = vrot.lane.b32.xlu0 %v694, 112
        %v925 = vpop.permute.xlu0 %924
        %926 = vrot.lane.b32.xlu0 %v696, 112
        %v927 = vpop.permute.xlu0 %926
        %v929 = vsel %vm698, %v925, 0
        %v932 = vsel %vm698, %v927, 0
        %934 = vmatprep.subr.bf16.mxu0 0
        %935 = vmatpush1.bf16.xpose.msra.mxu0 %v932
        %936 = vmatprep.subr.bf16.mxu0 0
        %937 = vmatpush1.bf16.xpose.msra.mxu0 0
        %938 = vmatprep.subr.bf16.mxu0 0
        %939 = vmatpush1.bf16.xpose.msra.mxu0 0
        %940 = vmatprep.subr.bf16.mxu0 0
        %941 = vmatpush1.bf16.xpose.msra.mxu0 0
        %942 = vmatprep.subr.bf16.mxu0 0
        %943 = vmatpush1.bf16.xpose.msra.mxu0 0
        %944 = vmatprep.subr.bf16.mxu0 0
        %945 = vmatpush1.bf16.xpose.msra.mxu0 0
        %946 = vmatprep.subr.bf16.mxu0 0
        %947 = vmatpush1.bf16.xpose.msra.mxu0 0
        %948 = vmatprep.subr.bf16.mxu0 0
        %949 = vmatpush1.bf16.xpose.msra.mxu0 0
        %950 = vmatprep.subr.bf16.mxu0 0
        %951 = vmatpush1.bf16.xpose.msra.mxu0 0
        %952 = vmatprep.subr.bf16.mxu0 0
        %953 = vmatpush1.bf16.xpose.msra.mxu0 0
        %954 = vmatprep.subr.bf16.mxu0 0
        %955 = vmatpush1.bf16.xpose.msra.mxu0 0
        %956 = vmatprep.subr.bf16.mxu0 0
        %957 = vmatpush1.bf16.xpose.msra.mxu0 0
        %958 = vmatprep.subr.bf16.mxu0 0
        %959 = vmatpush1.bf16.xpose.msra.mxu0 0
        %960 = vmatprep.subr.bf16.mxu0 0
        %961 = vmatpush1.bf16.xpose.msra.mxu0 0
        %962 = vmatprep.subr.bf16.mxu0 0
        %963 = vmatpush1.bf16.xpose.msra.mxu0 0
        %964 = vmatprep.subr.bf16.mxu0 0
        %965 = vmatpush1.bf16.xpose.msra.mxu0 0
        %966 = vmatprep.mubr.bf16.mxu0 0
        %967 = vmatmul.mubr.bf16.gmra.mrb[0].mxu0 %v929
        %v968 = vpop.f32.mrb[0].mxu0
        %v969 = vadd.f32 0.0, %v968
        %v970 = vpop.f32.mrb[0].mxu0
        %v971 = vpop.f32.mrb[0].mxu0
        %v972 = vpop.f32.mrb[0].mxu0
        %973 = vdwg.mxu0
        %975 = vrot.lane.b32.xlu0 %v695, 112
        %v976 = vpop.permute.xlu0 %975
        %977 = vrot.lane.b32.xlu0 %v697, 112
        %v978 = vpop.permute.xlu0 %977
        %v980 = vsel %vm698, %v976, 0
        %v983 = vsel %vm698, %v978, 0
        %985 = vmatprep.subr.bf16.mxu0 0
        %986 = vmatpush1.bf16.xpose.msra.mxu0 %v983
        %987 = vmatprep.subr.bf16.mxu0 0
        %988 = vmatpush1.bf16.xpose.msra.mxu0 0
        %989 = vmatprep.subr.bf16.mxu0 0
        %990 = vmatpush1.bf16.xpose.msra.mxu0 0
        %991 = vmatprep.subr.bf16.mxu0 0
        %992 = vmatpush1.bf16.xpose.msra.mxu0 0
        %993 = vmatprep.subr.bf16.mxu0 0
        %994 = vmatpush1.bf16.xpose.msra.mxu0 0
        %995 = vmatprep.subr.bf16.mxu0 0
        %996 = vmatpush1.bf16.xpose.msra.mxu0 0
        %997 = vmatprep.subr.bf16.mxu0 0
        %998 = vmatpush1.bf16.xpose.msra.mxu0 0
        %999 = vmatprep.subr.bf16.mxu0 0
        %1000 = vmatpush1.bf16.xpose.msra.mxu0 0
        %1001 = vmatprep.subr.bf16.mxu0 0
        %1002 = vmatpush1.bf16.xpose.msra.mxu0 0
        %1003 = vmatprep.subr.bf16.mxu0 0
        %1004 = vmatpush1.bf16.xpose.msra.mxu0 0
        %1005 = vmatprep.subr.bf16.mxu0 0
        %1006 = vmatpush1.bf16.xpose.msra.mxu0 0
        %1007 = vmatprep.subr.bf16.mxu0 0
        %1008 = vmatpush1.bf16.xpose.msra.mxu0 0
        %1009 = vmatprep.subr.bf16.mxu0 0
        %1010 = vmatpush1.bf16.xpose.msra.mxu0 0
        %1011 = vmatprep.subr.bf16.mxu0 0
        %1012 = vmatpush1.bf16.xpose.msra.mxu0 0
        %1013 = vmatprep.subr.bf16.mxu0 0
        %1014 = vmatpush1.bf16.xpose.msra.mxu0 0
        %1015 = vmatprep.subr.bf16.mxu0 0
        %1016 = vmatpush1.bf16.xpose.msra.mxu0 0
        %1017 = vmatprep.mubr.bf16.mxu0 0
        %1018 = vmatmul.mubr.bf16.gmra.mrb[0].mxu0 %v980
        %v1019 = vpop.f32.mrb[0].mxu0
        %v1020 = vadd.f32 0.0, %v1019
        %v1021 = vpop.f32.mrb[0].mxu0
        %v1022 = vpop.f32.mrb[0].mxu0
        %v1023 = vpop.f32.mrb[0].mxu0
        %1024 = vdwg.mxu0
        %v1025 = vsel %vm793, %v969, -inf
        %v1026 = vsel %vm794, %v1020, -inf
        %v1027 = vsel %vm797, %v1025, -inf
        %1028 = vmax.xlane.f32.xlu0 %v1027
        %v1029 = vpop.xlane.xlu0 %1028
        %v1030 = vsel %vm797, %v1026, -inf
        %1031 = vmax.xlane.f32.xlu0 %v1030
        %v1032 = vpop.xlane.xlu0 %1031
        %v1033 = vsub.f32 %v1025, %v1029
        %v1034 = vsub.f32 %v1026, %v1032
        %v1035 = vmul.f32 %v1033, 1.442695
        %v1036 = vpow.pop %v1035
        %v1037 = vmul.f32 %v1034, 1.442695
        %v1038 = vpow.pop %v1037
        %v1039 = vsel %vm797, %v1036, 0.0
        %1040 = vadd.xlane.f32.xlu0 %v1039
        %v1041 = vpop.xlane.xlu0 %1040
        %v1042 = vsel %vm797, %v1038, 0.0
        %1043 = vadd.xlane.f32.xlu0 %v1042
        %v1044 = vpop.xlane.xlu0 %1043
        %v1045 = vrcp.pop %v1041
        %v1046 = vrcp.pop %v1044
        %v1047 = vmul.f32 %v1036, %v1045
        %v1048 = vmul.f32 %v1038, %v1046
        %v1049 = vpack.c.bf16 %v1047, %v1047
        %v1050 = vpack.c.bf16 %v1048, %v1048
        %1051 = vrot.lane.b32.xlu0 %v696, 48
        %v1052 = vpop.permute.xlu0 %1051
        %v1054 = vsel %vm797, %v1049, 0
        %v1057 = vsel %vm828, %v1052, 0
        %1059 = vmatprep.subr.bf16.mxu0 0
        %1060 = vmatpush1.bf16.msra.mxu0 %v1057
        %1061 = vmatprep.subr.bf16.mxu0 0
        %1062 = vmatpush1.bf16.msra.mxu0 0
        %1063 = vmatprep.subr.bf16.mxu0 0
        %1064 = vmatpush1.bf16.msra.mxu0 0
        %1065 = vmatprep.subr.bf16.mxu0 0
        %1066 = vmatpush1.bf16.msra.mxu0 0
        %1067 = vmatprep.subr.bf16.mxu0 0
        %1068 = vmatpush1.bf16.msra.mxu0 0
        %1069 = vmatprep.subr.bf16.mxu0 0
        %1070 = vmatpush1.bf16.msra.mxu0 0
        %1071 = vmatprep.subr.bf16.mxu0 0
        %1072 = vmatpush1.bf16.msra.mxu0 0
        %1073 = vmatprep.subr.bf16.mxu0 0
        %1074 = vmatpush1.bf16.msra.mxu0 0
        %1075 = vmatprep.subr.bf16.mxu0 0
        %1076 = vmatpush1.bf16.msra.mxu0 0
        %1077 = vmatprep.subr.bf16.mxu0 0
        %1078 = vmatpush1.bf16.msra.mxu0 0
        %1079 = vmatprep.subr.bf16.mxu0 0
        %1080 = vmatpush1.bf16.msra.mxu0 0
        %1081 = vmatprep.subr.bf16.mxu0 0
        %1082 = vmatpush1.bf16.msra.mxu0 0
        %1083 = vmatprep.subr.bf16.mxu0 0
        %1084 = vmatpush1.bf16.msra.mxu0 0
        %1085 = vmatprep.subr.bf16.mxu0 0
        %1086 = vmatpush1.bf16.msra.mxu0 0
        %1087 = vmatprep.subr.bf16.mxu0 0
        %1088 = vmatpush1.bf16.msra.mxu0 0
        %1089 = vmatprep.subr.bf16.mxu0 0
        %1090 = vmatpush1.bf16.msra.mxu0 0
        %1091 = vmatprep.mubr.bf16.mxu0 0
        %1092 = vmatmul.mubr.bf16.gmra.mrb[0].mxu0 %v1054
        %v1093 = vpop.f32.mrb[0].mxu0
        %v1094 = vadd.f32 0.0, %v1093
        %v1095 = vpop.f32.mrb[0].mxu0
        %v1096 = vpop.f32.mrb[0].mxu0
        %v1097 = vpop.f32.mrb[0].mxu0
        %1098 = vdwg.mxu0
        %1099 = vrot.lane.b32.xlu0 %v697, 48
        %v1100 = vpop.permute.xlu0 %1099
        %v1102 = vsel %vm797, %v1050, 0
        %v1105 = vsel %vm828, %v1100, 0
        %1107 = vmatprep.subr.bf16.mxu0 0
        %1108 = vmatpush1.bf16.msra.mxu0 %v1105
        %1109 = vmatprep.subr.bf16.mxu0 0
        %1110 = vmatpush1.bf16.msra.mxu0 0
        %1111 = vmatprep.subr.bf16.mxu0 0
        %1112 = vmatpush1.bf16.msra.mxu0 0
        %1113 = vmatprep.subr.bf16.mxu0 0
        %1114 = vmatpush1.bf16.msra.mxu0 0
        %1115 = vmatprep.subr.bf16.mxu0 0
        %1116 = vmatpush1.bf16.msra.mxu0 0
        %1117 = vmatprep.subr.bf16.mxu0 0
        %1118 = vmatpush1.bf16.msra.mxu0 0
        %1119 = vmatprep.subr.bf16.mxu0 0
        %1120 = vmatpush1.bf16.msra.mxu0 0
        %1121 = vmatprep.subr.bf16.mxu0 0
        %1122 = vmatpush1.bf16.msra.mxu0 0
        %1123 = vmatprep.subr.bf16.mxu0 0
        %1124 = vmatpush1.bf16.msra.mxu0 0
        %1125 = vmatprep.subr.bf16.mxu0 0
        %1126 = vmatpush1.bf16.msra.mxu0 0
        %1127 = vmatprep.subr.bf16.mxu0 0
        %1128 = vmatpush1.bf16.msra.mxu0 0
        %1129 = vmatprep.subr.bf16.mxu0 0
        %1130 = vmatpush1.bf16.msra.mxu0 0
        %1131 = vmatprep.subr.bf16.mxu0 0
        %1132 = vmatpush1.bf16.msra.mxu0 0
        %1133 = vmatprep.subr.bf16.mxu0 0
        %1134 = vmatpush1.bf16.msra.mxu0 0
        %1135 = vmatprep.subr.bf16.mxu0 0
        %1136 = vmatpush1.bf16.msra.mxu0 0
        %1137 = vmatprep.subr.bf16.mxu0 0
        %1138 = vmatpush1.bf16.msra.mxu0 0
        %1139 = vmatprep.mubr.bf16.mxu0 0
        %1140 = vmatmul.mubr.bf16.gmra.mrb[0].mxu0 %v1102
        %v1141 = vpop.f32.mrb[0].mxu0
        %v1142 = vadd.f32 0.0, %v1141
        %v1143 = vpop.f32.mrb[0].mxu0
        %v1144 = vpop.f32.mrb[0].mxu0
        %v1145 = vpop.f32.mrb[0].mxu0
        %1146 = vdwg.mxu0
        %v1147 = vpack.c.bf16 %v1142, %v1094
        %1149 = vrot.lane.b32.xlu0 %v1147, 16
        %v1150 = vpop.permute.xlu0 %1149
        %vm1152 = vcmask 261248
        %1153 = vst.msk [vmem:[#allocation2] sm:$0xff] %vm1152, %v1150
        %1154 = vrot.lane.b32.xlu0 %v694, 96
        %v1155 = vpop.permute.xlu0 %1154
        %1156 = vrot.lane.b32.xlu0 %v696, 96
        %v1157 = vpop.permute.xlu0 %1156
        %v1159 = vsel %vm698, %v1155, 0
        %v1162 = vsel %vm698, %v1157, 0
        %1164 = vmatprep.subr.bf16.mxu0 0
        %1165 = vmatpush1.bf16.xpose.msra.mxu0 %v1162
        %1166 = vmatprep.subr.bf16.mxu0 0
        %1167 = vmatpush1.bf16.xpose.msra.mxu0 0
        %1168 = vmatprep.subr.bf16.mxu0 0
        %1169 = vmatpush1.bf16.xpose.msra.mxu0 0
        %1170 = vmatprep.subr.bf16.mxu0 0
        %1171 = vmatpush1.bf16.xpose.msra.mxu0 0
        %1172 = vmatprep.subr.bf16.mxu0 0
        %1173 = vmatpush1.bf16.xpose.msra.mxu0 0
        %1174 = vmatprep.subr.bf16.mxu0 0
        %1175 = vmatpush1.bf16.xpose.msra.mxu0 0
        %1176 = vmatprep.subr.bf16.mxu0 0
        %1177 = vmatpush1.bf16.xpose.msra.mxu0 0
        %1178 = vmatprep.subr.bf16.mxu0 0
        %1179 = vmatpush1.bf16.xpose.msra.mxu0 0
        %1180 = vmatprep.subr.bf16.mxu0 0
        %1181 = vmatpush1.bf16.xpose.msra.mxu0 0
        %1182 = vmatprep.subr.bf16.mxu0 0
        %1183 = vmatpush1.bf16.xpose.msra.mxu0 0
        %1184 = vmatprep.subr.bf16.mxu0 0
        %1185 = vmatpush1.bf16.xpose.msra.mxu0 0
        %1186 = vmatprep.subr.bf16.mxu0 0
        %1187 = vmatpush1.bf16.xpose.msra.mxu0 0
        %1188 = vmatprep.subr.bf16.mxu0 0
        %1189 = vmatpush1.bf16.xpose.msra.mxu0 0
        %1190 = vmatprep.subr.bf16.mxu0 0
        %1191 = vmatpush1.bf16.xpose.msra.mxu0 0
        %1192 = vmatprep.subr.bf16.mxu0 0
        %1193 = vmatpush1.bf16.xpose.msra.mxu0 0
        %1194 = vmatprep.subr.bf16.mxu0 0
        %1195 = vmatpush1.bf16.xpose.msra.mxu0 0
        %1196 = vmatprep.mubr.bf16.mxu0 0
        %1197 = vmatmul.mubr.bf16.gmra.mrb[0].mxu0 %v1159
        %v1198 = vpop.f32.mrb[0].mxu0
        %v1199 = vadd.f32 0.0, %v1198
        %v1200 = vpop.f32.mrb[0].mxu0
        %v1201 = vpop.f32.mrb[0].mxu0
        %v1202 = vpop.f32.mrb[0].mxu0
        %1203 = vdwg.mxu0
        %1204 = vrot.lane.b32.xlu0 %v695, 96
        %v1205 = vpop.permute.xlu0 %1204
        %1206 = vrot.lane.b32.xlu0 %v697, 96
        %v1207 = vpop.permute.xlu0 %1206
        %v1209 = vsel %vm698, %v1205, 0
        %v1212 = vsel %vm698, %v1207, 0
        %1214 = vmatprep.subr.bf16.mxu0 0
        %1215 = vmatpush1.bf16.xpose.msra.mxu0 %v1212
        %1216 = vmatprep.subr.bf16.mxu0 0
        %1217 = vmatpush1.bf16.xpose.msra.mxu0 0
        %1218 = vmatprep.subr.bf16.mxu0 0
        %1219 = vmatpush1.bf16.xpose.msra.mxu0 0
        %1220 = vmatprep.subr.bf16.mxu0 0
        %1221 = vmatpush1.bf16.xpose.msra.mxu0 0
        %1222 = vmatprep.subr.bf16.mxu0 0
        %1223 = vmatpush1.bf16.xpose.msra.mxu0 0
        %1224 = vmatprep.subr.bf16.mxu0 0
        %1225 = vmatpush1.bf16.xpose.msra.mxu0 0
        %1226 = vmatprep.subr.bf16.mxu0 0
        %1227 = vmatpush1.bf16.xpose.msra.mxu0 0
        %1228 = vmatprep.subr.bf16.mxu0 0
        %1229 = vmatpush1.bf16.xpose.msra.mxu0 0
        %1230 = vmatprep.subr.bf16.mxu0 0
        %1231 = vmatpush1.bf16.xpose.msra.mxu0 0
        %1232 = vmatprep.subr.bf16.mxu0 0
        %1233 = vmatpush1.bf16.xpose.msra.mxu0 0
        %1234 = vmatprep.subr.bf16.mxu0 0
        %1235 = vmatpush1.bf16.xpose.msra.mxu0 0
        %1236 = vmatprep.subr.bf16.mxu0 0
        %1237 = vmatpush1.bf16.xpose.msra.mxu0 0
        %1238 = vmatprep.subr.bf16.mxu0 0
        %1239 = vmatpush1.bf16.xpose.msra.mxu0 0
        %1240 = vmatprep.subr.bf16.mxu0 0
        %1241 = vmatpush1.bf16.xpose.msra.mxu0 0
        %1242 = vmatprep.subr.bf16.mxu0 0
        %1243 = vmatpush1.bf16.xpose.msra.mxu0 0
        %1244 = vmatprep.subr.bf16.mxu0 0
        %1245 = vmatpush1.bf16.xpose.msra.mxu0 0
        %1246 = vmatprep.mubr.bf16.mxu0 0
        %1247 = vmatmul.mubr.bf16.gmra.mrb[0].mxu0 %v1209
        %v1248 = vpop.f32.mrb[0].mxu0
        %v1249 = vadd.f32 0.0, %v1248
        %v1250 = vpop.f32.mrb[0].mxu0
        %v1251 = vpop.f32.mrb[0].mxu0
        %v1252 = vpop.f32.mrb[0].mxu0
        %1253 = vdwg.mxu0
        %v1254 = vsel %vm793, %v1199, -inf
        %v1255 = vsel %vm794, %v1249, -inf
        %v1256 = vsel %vm797, %v1254, -inf
        %1257 = vmax.xlane.f32.xlu0 %v1256
        %v1258 = vpop.xlane.xlu0 %1257
        %v1259 = vsel %vm797, %v1255, -inf
        %1260 = vmax.xlane.f32.xlu0 %v1259
        %v1261 = vpop.xlane.xlu0 %1260
        %v1262 = vsub.f32 %v1254, %v1258
        %v1263 = vsub.f32 %v1255, %v1261
        %v1264 = vmul.f32 %v1262, 1.442695
        %v1265 = vpow.pop %v1264
        %v1266 = vmul.f32 %v1263, 1.442695
        %v1267 = vpow.pop %v1266
        %v1268 = vsel %vm797, %v1265, 0.0
        %1269 = vadd.xlane.f32.xlu0 %v1268
        %v1270 = vpop.xlane.xlu0 %1269
        %v1271 = vsel %vm797, %v1267, 0.0
        %1272 = vadd.xlane.f32.xlu0 %v1271
        %v1273 = vpop.xlane.xlu0 %1272
        %v1274 = vrcp.pop %v1270
        %v1275 = vrcp.pop %v1273
        %v1276 = vmul.f32 %v1265, %v1274
        %v1277 = vmul.f32 %v1267, %v1275
        %v1278 = vpack.c.bf16 %v1276, %v1276
        %v1279 = vpack.c.bf16 %v1277, %v1277
        %1280 = vrot.lane.b32.xlu0 %v696, 32
        %v1281 = vpop.permute.xlu0 %1280
        %v1283 = vsel %vm797, %v1278, 0
        %v1286 = vsel %vm828, %v1281, 0
        %1288 = vmatprep.subr.bf16.mxu0 0
        %1289 = vmatpush1.bf16.msra.mxu0 %v1286
        %1290 = vmatprep.subr.bf16.mxu0 0
        %1291 = vmatpush1.bf16.msra.mxu0 0
        %1292 = vmatprep.subr.bf16.mxu0 0
        %1293 = vmatpush1.bf16.msra.mxu0 0
        %1294 = vmatprep.subr.bf16.mxu0 0
        %1295 = vmatpush1.bf16.msra.mxu0 0
        %1296 = vmatprep.subr.bf16.mxu0 0
        %1297 = vmatpush1.bf16.msra.mxu0 0
        %1298 = vmatprep.subr.bf16.mxu0 0
        %1299 = vmatpush1.bf16.msra.mxu0 0
        %1300 = vmatprep.subr.bf16.mxu0 0
        %1301 = vmatpush1.bf16.msra.mxu0 0
        %1302 = vmatprep.subr.bf16.mxu0 0
        %1303 = vmatpush1.bf16.msra.mxu0 0
        %1304 = vmatprep.subr.bf16.mxu0 0
        %1305 = vmatpush1.bf16.msra.mxu0 0
        %1306 = vmatprep.subr.bf16.mxu0 0
        %1307 = vmatpush1.bf16.msra.mxu0 0
        %1308 = vmatprep.subr.bf16.mxu0 0
        %1309 = vmatpush1.bf16.msra.mxu0 0
        %1310 = vmatprep.subr.bf16.mxu0 0
        %1311 = vmatpush1.bf16.msra.mxu0 0
        %1312 = vmatprep.subr.bf16.mxu0 0
        %1313 = vmatpush1.bf16.msra.mxu0 0
        %1314 = vmatprep.subr.bf16.mxu0 0
        %1315 = vmatpush1.bf16.msra.mxu0 0
        %1316 = vmatprep.subr.bf16.mxu0 0
        %1317 = vmatpush1.bf16.msra.mxu0 0
        %1318 = vmatprep.subr.bf16.mxu0 0
        %1319 = vmatpush1.bf16.msra.mxu0 0
        %1320 = vmatprep.mubr.bf16.mxu0 0
        %1321 = vmatmul.mubr.bf16.gmra.mrb[0].mxu0 %v1283
        %v1322 = vpop.f32.mrb[0].mxu0
        %v1323 = vadd.f32 0.0, %v1322
        %v1324 = vpop.f32.mrb[0].mxu0
        %v1325 = vpop.f32.mrb[0].mxu0
        %v1326 = vpop.f32.mrb[0].mxu0
        %1327 = vdwg.mxu0
        %1328 = vrot.lane.b32.xlu0 %v697, 32
        %v1329 = vpop.permute.xlu0 %1328
        %v1331 = vsel %vm797, %v1279, 0
        %v1334 = vsel %vm828, %v1329, 0
        %1336 = vmatprep.subr.bf16.mxu0 0
        %1337 = vmatpush1.bf16.msra.mxu0 %v1334
        %1338 = vmatprep.subr.bf16.mxu0 0
        %1339 = vmatpush1.bf16.msra.mxu0 0
        %1340 = vmatprep.subr.bf16.mxu0 0
        %1341 = vmatpush1.bf16.msra.mxu0 0
        %1342 = vmatprep.subr.bf16.mxu0 0
        %1343 = vmatpush1.bf16.msra.mxu0 0
        %1344 = vmatprep.subr.bf16.mxu0 0
        %1345 = vmatpush1.bf16.msra.mxu0 0
        %1346 = vmatprep.subr.bf16.mxu0 0
        %1347 = vmatpush1.bf16.msra.mxu0 0
        %1348 = vmatprep.subr.bf16.mxu0 0
        %1349 = vmatpush1.bf16.msra.mxu0 0
        %1350 = vmatprep.subr.bf16.mxu0 0
        %1351 = vmatpush1.bf16.msra.mxu0 0
        %1352 = vmatprep.subr.bf16.mxu0 0
        %1353 = vmatpush1.bf16.msra.mxu0 0
        %1354 = vmatprep.subr.bf16.mxu0 0
        %1355 = vmatpush1.bf16.msra.mxu0 0
        %1356 = vmatprep.subr.bf16.mxu0 0
        %1357 = vmatpush1.bf16.msra.mxu0 0
        %1358 = vmatprep.subr.bf16.mxu0 0
        %1359 = vmatpush1.bf16.msra.mxu0 0
        %1360 = vmatprep.subr.bf16.mxu0 0
        %1361 = vmatpush1.bf16.msra.mxu0 0
        %1362 = vmatprep.subr.bf16.mxu0 0
        %1363 = vmatpush1.bf16.msra.mxu0 0
        %1364 = vmatprep.subr.bf16.mxu0 0
        %1365 = vmatpush1.bf16.msra.mxu0 0
        %1366 = vmatprep.subr.bf16.mxu0 0
        %1367 = vmatpush1.bf16.msra.mxu0 0
        %1368 = vmatprep.mubr.bf16.mxu0 0
        %1369 = vmatmul.mubr.bf16.gmra.mrb[0].mxu0 %v1331
        %v1370 = vpop.f32.mrb[0].mxu0
        %v1371 = vadd.f32 0.0, %v1370
        %v1372 = vpop.f32.mrb[0].mxu0
        %v1373 = vpop.f32.mrb[0].mxu0
        %v1374 = vpop.f32.mrb[0].mxu0
        %1375 = vdwg.mxu0
        %v1376 = vpack.c.bf16 %v1371, %v1323
        %1378 = vrot.lane.b32.xlu0 %v1376, 32
        %v1379 = vpop.permute.xlu0 %1378
        %vm1381 = vcmask 392448
        %1382 = vst.msk [vmem:[#allocation2] sm:$0xff] %vm1381, %v1379
        %1383 = vrot.lane.b32.xlu0 %v694, 80
        %v1384 = vpop.permute.xlu0 %1383
        %1385 = vrot.lane.b32.xlu0 %v696, 80
        %v1386 = vpop.permute.xlu0 %1385
        %v1388 = vsel %vm698, %v1384, 0
        %v1391 = vsel %vm698, %v1386, 0
        %1393 = vmatprep.subr.bf16.mxu0 0
        %1394 = vmatpush1.bf16.xpose.msra.mxu0 %v1391
        %1395 = vmatprep.subr.bf16.mxu0 0
        %1396 = vmatpush1.bf16.xpose.msra.mxu0 0
        %1397 = vmatprep.subr.bf16.mxu0 0
        %1398 = vmatpush1.bf16.xpose.msra.mxu0 0
        %1399 = vmatprep.subr.bf16.mxu0 0
        %1400 = vmatpush1.bf16.xpose.msra.mxu0 0
        %1401 = vmatprep.subr.bf16.mxu0 0
        %1402 = vmatpush1.bf16.xpose.msra.mxu0 0
        %1403 = vmatprep.subr.bf16.mxu0 0
        %1404 = vmatpush1.bf16.xpose.msra.mxu0 0
        %1405 = vmatprep.subr.bf16.mxu0 0
        %1406 = vmatpush1.bf16.xpose.msra.mxu0 0
        %1407 = vmatprep.subr.bf16.mxu0 0
        %1408 = vmatpush1.bf16.xpose.msra.mxu0 0
        %1409 = vmatprep.subr.bf16.mxu0 0
        %1410 = vmatpush1.bf16.xpose.msra.mxu0 0
        %1411 = vmatprep.subr.bf16.mxu0 0
        %1412 = vmatpush1.bf16.xpose.msra.mxu0 0
        %1413 = vmatprep.subr.bf16.mxu0 0
        %1414 = vmatpush1.bf16.xpose.msra.mxu0 0
        %1415 = vmatprep.subr.bf16.mxu0 0
        %1416 = vmatpush1.bf16.xpose.msra.mxu0 0
        %1417 = vmatprep.subr.bf16.mxu0 0
        %1418 = vmatpush1.bf16.xpose.msra.mxu0 0
        %1419 = vmatprep.subr.bf16.mxu0 0
        %1420 = vmatpush1.bf16.xpose.msra.mxu0 0
        %1421 = vmatprep.subr.bf16.mxu0 0
        %1422 = vmatpush1.bf16.xpose.msra.mxu0 0
        %1423 = vmatprep.subr.bf16.mxu0 0
        %1424 = vmatpush1.bf16.xpose.msra.mxu0 0
        %1425 = vmatprep.mubr.bf16.mxu0 0
        %1426 = vmatmul.mubr.bf16.gmra.mrb[0].mxu0 %v1388
        %v1427 = vpop.f32.mrb[0].mxu0
        %v1428 = vadd.f32 0.0, %v1427
        %v1429 = vpop.f32.mrb[0].mxu0
        %v1430 = vpop.f32.mrb[0].mxu0
        %v1431 = vpop.f32.mrb[0].mxu0
        %1432 = vdwg.mxu0
        %1433 = vrot.lane.b32.xlu0 %v695, 80
        %v1434 = vpop.permute.xlu0 %1433
        %1435 = vrot.lane.b32.xlu0 %v697, 80
        %v1436 = vpop.permute.xlu0 %1435
        %v1438 = vsel %vm698, %v1434, 0
        %v1441 = vsel %vm698, %v1436, 0
        %1443 = vmatprep.subr.bf16.mxu0 0
        %1444 = vmatpush1.bf16.xpose.msra.mxu0 %v1441
        %1445 = vmatprep.subr.bf16.mxu0 0
        %1446 = vmatpush1.bf16.xpose.msra.mxu0 0
        %1447 = vmatprep.subr.bf16.mxu0 0
        %1448 = vmatpush1.bf16.xpose.msra.mxu0 0
        %1449 = vmatprep.subr.bf16.mxu0 0
        %1450 = vmatpush1.bf16.xpose.msra.mxu0 0
        %1451 = vmatprep.subr.bf16.mxu0 0
        %1452 = vmatpush1.bf16.xpose.msra.mxu0 0
        %1453 = vmatprep.subr.bf16.mxu0 0
        %1454 = vmatpush1.bf16.xpose.msra.mxu0 0
        %1455 = vmatprep.subr.bf16.mxu0 0
        %1456 = vmatpush1.bf16.xpose.msra.mxu0 0
        %1457 = vmatprep.subr.bf16.mxu0 0
        %1458 = vmatpush1.bf16.xpose.msra.mxu0 0
        %1459 = vmatprep.subr.bf16.mxu0 0
        %1460 = vmatpush1.bf16.xpose.msra.mxu0 0
        %1461 = vmatprep.subr.bf16.mxu0 0
        %1462 = vmatpush1.bf16.xpose.msra.mxu0 0
        %1463 = vmatprep.subr.bf16.mxu0 0
        %1464 = vmatpush1.bf16.xpose.msra.mxu0 0
        %1465 = vmatprep.subr.bf16.mxu0 0
        %1466 = vmatpush1.bf16.xpose.msra.mxu0 0
        %1467 = vmatprep.subr.bf16.mxu0 0
        %1468 = vmatpush1.bf16.xpose.msra.mxu0 0
        %1469 = vmatprep.subr.bf16.mxu0 0
        %1470 = vmatpush1.bf16.xpose.msra.mxu0 0
        %1471 = vmatprep.subr.bf16.mxu0 0
        %1472 = vmatpush1.bf16.xpose.msra.mxu0 0
        %1473 = vmatprep.subr.bf16.mxu0 0
        %1474 = vmatpush1.bf16.xpose.msra.mxu0 0
        %1475 = vmatprep.mubr.bf16.mxu0 0
        %1476 = vmatmul.mubr.bf16.gmra.mrb[0].mxu0 %v1438
        %v1477 = vpop.f32.mrb[0].mxu0
        %v1478 = vadd.f32 0.0, %v1477
        %v1479 = vpop.f32.mrb[0].mxu0
        %v1480 = vpop.f32.mrb[0].mxu0
        %v1481 = vpop.f32.mrb[0].mxu0
        %1482 = vdwg.mxu0
        %v1483 = vsel %vm793, %v1428, -inf
        %v1484 = vsel %vm794, %v1478, -inf
        %v1485 = vsel %vm797, %v1483, -inf
        %1486 = vmax.xlane.f32.xlu0 %v1485
        %v1487 = vpop.xlane.xlu0 %1486
        %v1488 = vsel %vm797, %v1484, -inf
        %1489 = vmax.xlane.f32.xlu0 %v1488
        %v1490 = vpop.xlane.xlu0 %1489
        %v1491 = vsub.f32 %v1483, %v1487
        %v1492 = vsub.f32 %v1484, %v1490
        %v1493 = vmul.f32 %v1491, 1.442695
        %v1494 = vpow.pop %v1493
        %v1495 = vmul.f32 %v1492, 1.442695
        %v1496 = vpow.pop %v1495
        %v1497 = vsel %vm797, %v1494, 0.0
        %1498 = vadd.xlane.f32.xlu0 %v1497
        %v1499 = vpop.xlane.xlu0 %1498
        %v1500 = vsel %vm797, %v1496, 0.0
        %1501 = vadd.xlane.f32.xlu0 %v1500
        %v1502 = vpop.xlane.xlu0 %1501
        %v1503 = vrcp.pop %v1499
        %v1504 = vrcp.pop %v1502
        %v1505 = vmul.f32 %v1494, %v1503
        %v1506 = vmul.f32 %v1496, %v1504
        %v1507 = vpack.c.bf16 %v1505, %v1505
        %v1508 = vpack.c.bf16 %v1506, %v1506
        %1509 = vrot.lane.b32.xlu0 %v696, 16
        %v1510 = vpop.permute.xlu0 %1509
        %v1512 = vsel %vm797, %v1507, 0
        %v1515 = vsel %vm828, %v1510, 0
        %1517 = vmatprep.subr.bf16.mxu0 0
        %1518 = vmatpush1.bf16.msra.mxu0 %v1515
        %1519 = vmatprep.subr.bf16.mxu0 0
        %1520 = vmatpush1.bf16.msra.mxu0 0
        %1521 = vmatprep.subr.bf16.mxu0 0
        %1522 = vmatpush1.bf16.msra.mxu0 0
        %1523 = vmatprep.subr.bf16.mxu0 0
        %1524 = vmatpush1.bf16.msra.mxu0 0
        %1525 = vmatprep.subr.bf16.mxu0 0
        %1526 = vmatpush1.bf16.msra.mxu0 0
        %1527 = vmatprep.subr.bf16.mxu0 0
        %1528 = vmatpush1.bf16.msra.mxu0 0
        %1529 = vmatprep.subr.bf16.mxu0 0
        %1530 = vmatpush1.bf16.msra.mxu0 0
        %1531 = vmatprep.subr.bf16.mxu0 0
        %1532 = vmatpush1.bf16.msra.mxu0 0
        %1533 = vmatprep.subr.bf16.mxu0 0
        %1534 = vmatpush1.bf16.msra.mxu0 0
        %1535 = vmatprep.subr.bf16.mxu0 0
        %1536 = vmatpush1.bf16.msra.mxu0 0
        %1537 = vmatprep.subr.bf16.mxu0 0
        %1538 = vmatpush1.bf16.msra.mxu0 0
        %1539 = vmatprep.subr.bf16.mxu0 0
        %1540 = vmatpush1.bf16.msra.mxu0 0
        %1541 = vmatprep.subr.bf16.mxu0 0
        %1542 = vmatpush1.bf16.msra.mxu0 0
        %1543 = vmatprep.subr.bf16.mxu0 0
        %1544 = vmatpush1.bf16.msra.mxu0 0
        %1545 = vmatprep.subr.bf16.mxu0 0
        %1546 = vmatpush1.bf16.msra.mxu0 0
        %1547 = vmatprep.subr.bf16.mxu0 0
        %1548 = vmatpush1.bf16.msra.mxu0 0
        %1549 = vmatprep.mubr.bf16.mxu0 0
        %1550 = vmatmul.mubr.bf16.gmra.mrb[0].mxu0 %v1512
        %v1551 = vpop.f32.mrb[0].mxu0
        %v1552 = vadd.f32 0.0, %v1551
        %v1553 = vpop.f32.mrb[0].mxu0
        %v1554 = vpop.f32.mrb[0].mxu0
        %v1555 = vpop.f32.mrb[0].mxu0
        %1556 = vdwg.mxu0
        %1557 = vrot.lane.b32.xlu0 %v697, 16
        %v1558 = vpop.permute.xlu0 %1557
        %v1560 = vsel %vm797, %v1508, 0
        %v1563 = vsel %vm828, %v1558, 0
        %1565 = vmatprep.subr.bf16.mxu0 0
        %1566 = vmatpush1.bf16.msra.mxu0 %v1563
        %1567 = vmatprep.subr.bf16.mxu0 0
        %1568 = vmatpush1.bf16.msra.mxu0 0
        %1569 = vmatprep.subr.bf16.mxu0 0
        %1570 = vmatpush1.bf16.msra.mxu0 0
        %1571 = vmatprep.subr.bf16.mxu0 0
        %1572 = vmatpush1.bf16.msra.mxu0 0
        %1573 = vmatprep.subr.bf16.mxu0 0
        %1574 = vmatpush1.bf16.msra.mxu0 0
        %1575 = vmatprep.subr.bf16.mxu0 0
        %1576 = vmatpush1.bf16.msra.mxu0 0
        %1577 = vmatprep.subr.bf16.mxu0 0
        %1578 = vmatpush1.bf16.msra.mxu0 0
        %1579 = vmatprep.subr.bf16.mxu0 0
        %1580 = vmatpush1.bf16.msra.mxu0 0
        %1581 = vmatprep.subr.bf16.mxu0 0
        %1582 = vmatpush1.bf16.msra.mxu0 0
        %1583 = vmatprep.subr.bf16.mxu0 0
        %1584 = vmatpush1.bf16.msra.mxu0 0
        %1585 = vmatprep.subr.bf16.mxu0 0
        %1586 = vmatpush1.bf16.msra.mxu0 0
        %1587 = vmatprep.subr.bf16.mxu0 0
        %1588 = vmatpush1.bf16.msra.mxu0 0
        %1589 = vmatprep.subr.bf16.mxu0 0
        %1590 = vmatpush1.bf16.msra.mxu0 0
        %1591 = vmatprep.subr.bf16.mxu0 0
        %1592 = vmatpush1.bf16.msra.mxu0 0
        %1593 = vmatprep.subr.bf16.mxu0 0
        %1594 = vmatpush1.bf16.msra.mxu0 0
        %1595 = vmatprep.subr.bf16.mxu0 0
        %1596 = vmatpush1.bf16.msra.mxu0 0
        %1597 = vmatprep.mubr.bf16.mxu0 0
        %1598 = vmatmul.mubr.bf16.gmra.mrb[0].mxu0 %v1560
        %v1599 = vpop.f32.mrb[0].mxu0
        %v1600 = vadd.f32 0.0, %v1599
        %v1601 = vpop.f32.mrb[0].mxu0
        %v1602 = vpop.f32.mrb[0].mxu0
        %v1603 = vpop.f32.mrb[0].mxu0
        %1604 = vdwg.mxu0
        %v1605 = vpack.c.bf16 %v1600, %v1552
        %1607 = vrot.lane.b32.xlu0 %v1605, 48
        %v1608 = vpop.permute.xlu0 %1607
        %vm1610 = vcmask 523648
        %1611 = vst.msk [vmem:[#allocation2] sm:$0xff] %vm1610, %v1608
        %v1612 = vld [vmem:[#allocation2] sm:$0xff]
        %v1613 = vld [vmem:[%s8] sm:$0xf]
        %v1614 = vld [vmem:[%s8 + $0x4] sm:$0xf]
        %v1615 = vld [vmem:[%s8 + $0x8] sm:$0xf]
        %v1616 = vld [vmem:[%s8 + $0xc] sm:$0xf]
        %v1617 = vld [vmem:[%s8 + $0x10] sm:$0xf]
        %v1618 = vld [vmem:[%s8 + $0x14] sm:$0xf]
        %v1619 = vld [vmem:[%s8 + $0x18] sm:$0xf]
        %v1620 = vld [vmem:[%s8 + $0x1c] sm:$0xf]
        %v1621 = vld [vmem:[%s9] sm:$0x1]
        %v1623 = vlaneseq
        %v1624 = vshrl.u32 %v1623, 7
        %v1625 = vsub.s32 0, %v1624
        %v1626 = vrot.slane %v1621, %v1625
        %v1636 = vunpack.c.l.b16 %v1613
        %v1637 = vunpack.c.l.b16 %v1614
        %v1638 = vunpack.c.l.b16 %v1615
        %v1639 = vunpack.c.l.b16 %v1616
        %v1640 = vunpack.c.l.b16 %v1617
        %v1641 = vunpack.c.l.b16 %v1618
        %v1642 = vunpack.c.l.b16 %v1619
        %v1643 = vunpack.c.l.b16 %v1620
        %v1644 = vpack.c.b16 %v1637, %v1636
        %v1645 = vpack.c.b16 %v1639, %v1638
        %v1646 = vpack.c.b16 %v1641, %v1640
        %v1647 = vpack.c.b16 %v1643, %v1642
        %vm1652 = vcmask 523264
        %v1654 = vsel %vm1652, %v1612, 0
        %1656 = vmatprep.subr.bf16.mxu0 0
        %1657 = vmatpush1.bf16.msra.mxu0 %v1644
        %1658 = vmatprep.subr.bf16.mxu0 0
        %1659 = vmatpush1.bf16.msra.mxu0 %v1645
        %1660 = vmatprep.subr.bf16.mxu0 0
        %1661 = vmatpush1.bf16.msra.mxu0 %v1646
        %1662 = vmatprep.subr.bf16.mxu0 0
        %1663 = vmatpush1.bf16.msra.mxu0 %v1647
        %1664 = vmatprep.subr.bf16.mxu0 0
        %1665 = vmatpush1.bf16.msra.mxu0 0
        %1666 = vmatprep.subr.bf16.mxu0 0
        %1667 = vmatpush1.bf16.msra.mxu0 0
        %1668 = vmatprep.subr.bf16.mxu0 0
        %1669 = vmatpush1.bf16.msra.mxu0 0
        %1670 = vmatprep.subr.bf16.mxu0 0
        %1671 = vmatpush1.bf16.msra.mxu0 0
        %1672 = vmatprep.subr.bf16.mxu0 0
        %1673 = vmatpush1.bf16.msra.mxu0 0
        %1674 = vmatprep.subr.bf16.mxu0 0
        %1675 = vmatpush1.bf16.msra.mxu0 0
        %1676 = vmatprep.subr.bf16.mxu0 0
        %1677 = vmatpush1.bf16.msra.mxu0 0
        %1678 = vmatprep.subr.bf16.mxu0 0
        %1679 = vmatpush1.bf16.msra.mxu0 0
        %1680 = vmatprep.subr.bf16.mxu0 0
        %1681 = vmatpush1.bf16.msra.mxu0 0
        %1682 = vmatprep.subr.bf16.mxu0 0
        %1683 = vmatpush1.bf16.msra.mxu0 0
        %1684 = vmatprep.subr.bf16.mxu0 0
        %1685 = vmatpush1.bf16.msra.mxu0 0
        %1686 = vmatprep.subr.bf16.mxu0 0
        %1687 = vmatpush1.bf16.msra.mxu0 0
        %1688 = vmatprep.mubr.bf16.mxu0 0
        %1689 = vmatmul.mubr.bf16.gmra.mrb[0].mxu0 %v1654
        %v1690 = vpop.f32.mrb[0].mxu0
        %v1691 = vadd.f32 %v1626, %v1690
        %v1692 = vpop.f32.mrb[0].mxu0
        %v1693 = vpop.f32.mrb[0].mxu0
        %v1694 = vadd.f32 %v1626, %v1693
        %v1695 = vpop.f32.mrb[0].mxu0
        %1696 = vdwg.mxu0
        %v1697 = vadd.f32 %v1691, %v503
        %v1698 = vadd.f32 %v1694, %v504
        %v1699 = vld [vmem:[%s10] sm:$0x1]
        %v1700 = vld [vmem:[%s11] sm:$0x1]
        %v1701 = vsel %vm516, %v1697, 0.0
        %1702 = vadd.xlane.f32.xlu0 %v1701
        %v1703 = vpop.xlane.xlu0 %1702
        %v1704 = vsel %vm516, %v1698, 0.0
        %1705 = vadd.xlane.f32.xlu0 %v1704
        %v1706 = vpop.xlane.xlu0 %1705
        %v1707 = vmul.f32 %v1703, %v523
        %v1708 = vmul.f32 %v1706, %v523
        %v1709 = vsub.f32 %v1697, %v1707
        %v1710 = vsub.f32 %v1698, %v1708
        %v1711 = vmul.f32 %v1709, %v1709
        %v1712 = vmul.f32 %v1710, %v1710
        %v1713 = vsel %vm516, %v1711, 0.0
        %1714 = vadd.xlane.f32.xlu0 %v1713
        %v1715 = vpop.xlane.xlu0 %1714
        %v1716 = vsel %vm516, %v1712, 0.0
        %1717 = vadd.xlane.f32.xlu0 %v1716
        %v1718 = vpop.xlane.xlu0 %1717
        %v1719 = vmul.f32 %v1715, %v523
        %v1720 = vmul.f32 %v1718, %v523
        %v1721 = vadd.f32 %v1719, 1e-05
        %v1722 = vadd.f32 %v1720, 1e-05
        %v1723 = vrsqrt.pop %v1721
        %v1724 = vrsqrt.pop %v1722
        %v1725 = vmul.f32 %v1709, %v1723
        %v1726 = vmul.f32 %v1710, %v1724
        %v1728 = vlaneseq
        %v1729 = vshrl.u32 %v1728, 7
        %v1730 = vsub.s32 0, %v1729
        %v1731 = vrot.slane %v1699, %v1730
        %v1733 = vmul.f32 %v1725, %v1731
        %v1734 = vmul.f32 %v1726, %v1731
        %v1736 = vlaneseq
        %v1737 = vshrl.u32 %v1736, 7
        %v1738 = vsub.s32 0, %v1737
        %v1739 = vrot.slane %v1700, %v1738
        %v1741 = vadd.f32 %v1733, %v1739
        %v1742 = vadd.f32 %v1734, %v1739
        %v1743 = vpack.c.bf16 %v1742, %v1741
        %v1744 = vld [vmem:[%s12] sm:$0xf]
        %v1745 = vld [vmem:[%s12 + $0x4] sm:$0xf]
        %v1746 = vld [vmem:[%s12 + $0x8] sm:$0xf]
        %v1747 = vld [vmem:[%s12 + $0xc] sm:$0xf]
        %v1748 = vld [vmem:[%s13] sm:$0x1]
        %v1750 = vlaneseq
        %v1751 = vshrl.u32 %v1750, 7
        %v1752 = vsub.s32 0, %v1751
        %v1753 = vrot.slane %v1748, %v1752
        %v1759 = vunpack.c.l.b16 %v1744
        %v1760 = vunpack.c.l.b16 %v1745
        %v1761 = vunpack.c.l.b16 %v1746
        %v1762 = vunpack.c.l.b16 %v1747
        %v1763 = vpack.c.b16 %v1760, %v1759
        %v1764 = vpack.c.b16 %v1762, %v1761
        %v1768 = vsel %vm516, %v1743, 0
        %1770 = vmatprep.subr.bf16.mxu0 0
        %1771 = vmatpush1.bf16.msra.mxu0 %v1763
        %1772 = vmatprep.subr.bf16.mxu0 0
        %1773 = vmatpush1.bf16.msra.mxu0 %v1764
        %1774 = vmatprep.subr.bf16.mxu0 0
        %1775 = vmatpush1.bf16.msra.mxu0 0
        %1776 = vmatprep.subr.bf16.mxu0 0
        %1777 = vmatpush1.bf16.msra.mxu0 0
        %1778 = vmatprep.subr.bf16.mxu0 0
        %1779 = vmatpush1.bf16.msra.mxu0 0
        %1780 = vmatprep.subr.bf16.mxu0 0
        %1781 = vmatpush1.bf16.msra.mxu0 0
        %1782 = vmatprep.subr.bf16.mxu0 0
        %1783 = vmatpush1.bf16.msra.mxu0 0
        %1784 = vmatprep.subr.bf16.mxu0 0
        %1785 = vmatpush1.bf16.msra.mxu0 0
        %1786 = vmatprep.subr.bf16.mxu0 0
        %1787 = vmatpush1.bf16.msra.mxu0 0
        %1788 = vmatprep.subr.bf16.mxu0 0
        %1789 = vmatpush1.bf16.msra.mxu0 0
        %1790 = vmatprep.subr.bf16.mxu0 0
        %1791 = vmatpush1.bf16.msra.mxu0 0
        %1792 = vmatprep.subr.bf16.mxu0 0
        %1793 = vmatpush1.bf16.msra.mxu0 0
        %1794 = vmatprep.subr.bf16.mxu0 0
        %1795 = vmatpush1.bf16.msra.mxu0 0
        %1796 = vmatprep.subr.bf16.mxu0 0
        %1797 = vmatpush1.bf16.msra.mxu0 0
        %1798 = vmatprep.subr.bf16.mxu0 0
        %1799 = vmatpush1.bf16.msra.mxu0 0
        %1800 = vmatprep.subr.bf16.mxu0 0
        %1801 = vmatpush1.bf16.msra.mxu0 0
        %1802 = vmatprep.mubr.bf16.mxu0 0
        %1803 = vmatmul.mubr.bf16.gmra.mrb[0].mxu0 %v1768
        %v1804 = vpop.f32.mrb[0].mxu0
        %v1805 = vadd.f32 %v1753, %v1804
        %v1806 = vpop.f32.mrb[0].mxu0
        %v1807 = vpop.f32.mrb[0].mxu0
        %v1808 = vadd.f32 %v1753, %v1807
        %v1809 = vpop.f32.mrb[0].mxu0
        %1810 = vdwg.mxu0
        %v1811 = vmax.f32 %v1805, 0.0
        %v1812 = vmax.f32 %v1808, 0.0
        %v1813 = vpack.c.bf16 %v1812, %v1811
        %v1814 = vld [vmem:[%s14] sm:$0xf]
        %v1815 = vld [vmem:[%s14 + $0x4] sm:$0xf]
        %v1816 = vld [vmem:[%s14 + $0x8] sm:$0xf]
        %v1817 = vld [vmem:[%s14 + $0xc] sm:$0xf]
        %v1818 = vld [vmem:[%s14 + $0x10] sm:$0xf]
        %v1819 = vld [vmem:[%s14 + $0x14] sm:$0xf]
        %v1820 = vld [vmem:[%s14 + $0x18] sm:$0xf]
        %v1821 = vld [vmem:[%s14 + $0x1c] sm:$0xf]
        %v1822 = vld [vmem:[%s15] sm:$0x1]
        %v1824 = vlaneseq
        %v1825 = vshrl.u32 %v1824, 7
        %v1826 = vsub.s32 0, %v1825
        %v1827 = vrot.slane %v1822, %v1826
        %v1837 = vunpack.c.l.b16 %v1814
        %v1838 = vunpack.c.l.b16 %v1815
        %v1839 = vunpack.c.l.b16 %v1816
        %v1840 = vunpack.c.l.b16 %v1817
        %v1841 = vunpack.c.l.b16 %v1818
        %v1842 = vunpack.c.l.b16 %v1819
        %v1843 = vunpack.c.l.b16 %v1820
        %v1844 = vunpack.c.l.b16 %v1821
        %v1845 = vpack.c.b16 %v1838, %v1837
        %v1846 = vpack.c.b16 %v1840, %v1839
        %v1847 = vpack.c.b16 %v1842, %v1841
        %v1848 = vpack.c.b16 %v1844, %v1843
        %v1854 = vsel %vm1652, %v1813, 0
        %1856 = vmatprep.subr.bf16.mxu0 0
        %1857 = vmatpush1.bf16.msra.mxu0 %v1845
        %1858 = vmatprep.subr.bf16.mxu0 0
        %1859 = vmatpush1.bf16.msra.mxu0 %v1846
        %1860 = vmatprep.subr.bf16.mxu0 0
        %1861 = vmatpush1.bf16.msra.mxu0 %v1847
        %1862 = vmatprep.subr.bf16.mxu0 0
        %1863 = vmatpush1.bf16.msra.mxu0 %v1848
        %1864 = vmatprep.subr.bf16.mxu0 0
        %1865 = vmatpush1.bf16.msra.mxu0 0
        %1866 = vmatprep.subr.bf16.mxu0 0
        %1867 = vmatpush1.bf16.msra.mxu0 0
        %1868 = vmatprep.subr.bf16.mxu0 0
        %1869 = vmatpush1.bf16.msra.mxu0 0
        %1870 = vmatprep.subr.bf16.mxu0 0
        %1871 = vmatpush1.bf16.msra.mxu0 0
        %1872 = vmatprep.subr.bf16.mxu0 0
        %1873 = vmatpush1.bf16.msra.mxu0 0
        %1874 = vmatprep.subr.bf16.mxu0 0
        %1875 = vmatpush1.bf16.msra.mxu0 0
        %1876 = vmatprep.subr.bf16.mxu0 0
        %1877 = vmatpush1.bf16.msra.mxu0 0
        %1878 = vmatprep.subr.bf16.mxu0 0
        %1879 = vmatpush1.bf16.msra.mxu0 0
        %1880 = vmatprep.subr.bf16.mxu0 0
        %1881 = vmatpush1.bf16.msra.mxu0 0
        %1882 = vmatprep.subr.bf16.mxu0 0
        %1883 = vmatpush1.bf16.msra.mxu0 0
        %1884 = vmatprep.subr.bf16.mxu0 0
        %1885 = vmatpush1.bf16.msra.mxu0 0
        %1886 = vmatprep.subr.bf16.mxu0 0
        %1887 = vmatpush1.bf16.msra.mxu0 0
        %1888 = vmatprep.mubr.bf16.mxu0 0
        %1889 = vmatmul.mubr.bf16.gmra.mrb[0].mxu0 %v1854
        %v1890 = vpop.f32.mrb[0].mxu0
        %v1891 = vadd.f32 %v1827, %v1890
        %v1892 = vpop.f32.mrb[0].mxu0
        %v1893 = vpop.f32.mrb[0].mxu0
        %v1894 = vadd.f32 %v1827, %v1893
        %v1895 = vpop.f32.mrb[0].mxu0
        %1896 = vdwg.mxu0
        %v1897 = vadd.f32 %v1891, %v1697
        %v1898 = vadd.f32 %v1894, %v1698
        %1899 = vst.msk [vmem:[%s493] sm:$0xff] %vm516, %v1897
        %1900 = vst.msk [vmem:[%s493 + $0x8] sm:$0xff] %vm516, %v1898
        %s1901 = sand.u32 %s362, 1
        %s1902 = scalar_lea.sflag [#allocation6], %s1901
        %s1903 = sand.u32 %s362, 1
        %s1904 = smul.addr %s1903, 16
        %s1905 = scalar_lea.vmem [#allocation5], %s1904
        // Predicated region
        $region81: #{tpu_custom_call.1} parent=79 // pred_check
          %p1906 = pneg %p372
        $region82: #{tpu_custom_call.1} parent=79 // pred_check_branch
          %1908 = sbr.rel (%p1906) target = $region84
        $region83: #{tpu_custom_call.1} parent=79 // pred_region
          %s1909 = smul.u32 2, %s34
          %s1911 = ssub.s32 256, 256
          %1912 = vsyncadd %s1902, %s1911
          %s1913 = smul.addr %s1909, 128
          %s1914 = scalar_lea.hbm %s16, %s1913
          %s1915 = sshll.u32 %s1905, 4
          %s1916 = int_to_ptr.vmem [resolvable:$true] %s1915
          %1921 = dma.vmem_to_hbm [thread:$0]  %s1916, 256, %s1914, %s1902, 128, 128, 8
        $region84: #{tpu_custom_call.1} parent=79 // pred_fallthru
          _
      $region80: #{tpu_custom_call.1} parent=5 // pred_fallthru
        _
      %p1922 = scmp.le.s32.totalorder 2, %s29
      // Predicated region
      $region85: #{tpu_custom_call.1} parent=5 // pred_check
        %p1923 = pneg %p1922
      $region86: #{tpu_custom_call.1} parent=5 // pred_check_branch
        %1925 = sbr.rel (%p1923) target = $region88
      $region87: #{tpu_custom_call.1} parent=5 // pred_region
        %s1926 = ssub.s32 %s29, 2
        // Predicated region
        $region89: #{tpu_custom_call.1} parent=87 // pred_check
          %p1927 = pneg %p378
        $region90: #{tpu_custom_call.1} parent=87 // pred_check_branch
          %1929 = sbr.rel (%p1927) target = $region92
        $region91: #{tpu_custom_call.1} parent=87 // pred_region
          %s1930 = sand.u32 %s363, 1
          %s1931 = scalar_lea.sflag [#allocation6], %s1930
          %s1932 = sand.u32 %s363, 1
          %s1933 = smul.addr %s1932, 16
          %s1934 = scalar_lea.vmem [#allocation5], %s1933
          %1935 = dma.done %s1931, 256
        $region92: #{tpu_custom_call.1} parent=87 // pred_fallthru
          _
      $region88: #{tpu_custom_call.1} parent=5 // pred_fallthru
        _
    $region6: #{tpu_custom_call.1} parent=1 // loop_footer
      %s33 = sadd.s32 1, %s29
    $region7: #{tpu_custom_call.1} parent=1 // loop_footer_branch
      %28 = sbr.rel target = $region3
    $region8: #{tpu_custom_call.1} parent=1 // loop_exit
      _
    %1936 = vsyncpa [#allocation6], 1
    %s1937 = scalar_lea.sflag [#allocation6], 1
    %1938 = vsyncpa %s1937, 1

</llo_original>
